<compile_context>
chip_gen: v7x
topology: tpu7x:2x2x1
jax: 0.10.0
libtpu: 0.0.40
codegen_flags: <defaults>
</compile_context>

<pallas_src>
import numpy as np

import jax
import jax.numpy as jnp
from jax.experimental import pallas as pl
from jax.experimental.pallas import tpu as pltpu

LANE = 128
VMEM_LIMIT = 32 * 1024 * 1024   # well under v7x's 64 MiB physical VMEM
MAX_BATCH_TILE = 8              # keeps the f32 accumulators / vreg pressure sane


def _round_up(n, m):
    return ((n + m - 1) // m) * m


def _pick_batch_tile(B, max_bt=MAX_BATCH_TILE):
    """Batch tile such that the grid has >= 2 steps when B >= 2 (v7x 2 TCs)."""
    if B <= 1:
        return 1
    return max(1, min(max_bt, (B + 1) // 2))


# ----------------------------------------------------------------------------
# The single fused LeNet-5 kernel (one batch tile per grid step)
# ----------------------------------------------------------------------------
def _lenet5_kernel(x_ref, t1_ref, cb1_ref, t2_ref, cb2_ref,
                   w1_ref, fb1_ref, w2_ref, fb2_ref, w3_ref, fb3_ref,
                   o_ref, s1_ref, p1_ref, s2_ref):
    """One batch tile of `bt` images.

    x_ref  : (bt, 28, 28)   f32   raw input images
    t1_ref : (5, 28, 256)   bf16  conv1 width-Toeplitz weights (per kernel row)
    cb1_ref: (1, 256)       f32   conv1 bias, broadcast over lane layout
    t2_ref : (5, 128, 256)  bf16  conv2 width-Toeplitz weights
    cb2_ref: (1, 256)       f32   conv2 bias row
    w1_ref : (4, 128, 128)  bf16  fc1 weights split by pooled row h2 (K=4x64 real)
    fb1/2/3: (1, 128)       f32   fc bias rows
    w2_ref : (128, 128)     bf16  fc2 weights (120x84 real)
    w3_ref : (128, 128)     bf16  fc3 weights (84x10 real)
    o_ref  : (1, bt, 128)   f32   logits (first 10 lanes real)
    s1_ref : (bt*24, 128)   f32   scratch: W-pooled conv1 map (for H-pool)
    p1_ref : (bt, 12, 128)  bf16  scratch: pool1 output (72 real lanes)
    s2_ref : (bt*8, 128)    f32   scratch: W-pooled conv2 map (for H-pool + fc1)
    """
    bt = x_ref.shape[0]

    # ---- conv1: 5 banded-Toeplitz matmuls, contraction over width (K=28) ----
    # Output lane layout (chosen in t1): lane = wp*128 + c*12 + w2 where the
    # conv output column is w = 2*w2 + wp  (parity split -> free W-pool below).
    acc1 = jnp.zeros((bt * 24, 256), jnp.float32)
    for i in range(5):  # kernel rows
        lhs = x_ref[:, i:i + 24, :].astype(jnp.bfloat16).reshape(bt * 24, 28)
        acc1 = acc1 + jnp.dot(lhs, t1_ref[i], preferred_element_type=jnp.float32)
    y1 = jnp.maximum(acc1 + cb1_ref[...], 0.0)                 # bias + ReLU
    # pool1, W direction: even vs odd output columns are the two 128-lane
    # halves -> a lane-tile-aligned elementwise max (no shuffles).
    yw1 = jnp.maximum(y1[:, :128], y1[:, 128:])                # (bt*24, 128)
    # pool1, H direction: stride-2 row reads from a tiny f32 scratch.
    s1_ref[...] = yw1
    ev = s1_ref[pl.ds(0, bt * 12, stride=2), :]
    od = s1_ref[pl.ds(1, bt * 12, stride=2), :]
    p1 = jnp.maximum(ev, od)                                   # (bt*12, 128) f32
    p1_ref[...] = p1.astype(jnp.bfloat16).reshape(bt, 12, 128)

    # ---- conv2: 5 Toeplitz matmuls, contraction over (cin x width) = 72 real
    #      lanes (single 128-deep K tile -> no wasted K passes).
    # Output lane layout: lane = wp*128 + co*4 + w2, conv column w = 2*w2 + wp.
    acc2 = jnp.zeros((bt * 8, 256), jnp.float32)
    for i in range(5):
        lhs = p1_ref[:, i:i + 8, :].reshape(bt * 8, 128)
        acc2 = acc2 + jnp.dot(lhs, t2_ref[i], preferred_element_type=jnp.float32)
    y2 = jnp.maximum(acc2 + cb2_ref[...], 0.0)
    yw2 = jnp.maximum(y2[:, :128], y2[:, 128:])                # (bt*8, 128)
    s2_ref[...] = yw2

    # ---- pool2 H-direction fused with fc1 ----
    # The 256 real fc1 features are the 4 pooled rows x 64 lanes; contract them
    # as 4 K=64 matmuls so no 2048-wide zero-padded contraction is ever built.
    acc_fc = jnp.zeros((bt, 128), jnp.float32)
    for h2 in range(4):
        ra = s2_ref[pl.ds(2 * h2, bt, stride=8), :]            # rows (b, 2*h2)
        rb = s2_ref[pl.ds(2 * h2 + 1, bt, stride=8), :]        # rows (b, 2*h2+1)
        feat = jnp.maximum(ra, rb).astype(jnp.bfloat16)        # (bt, 128) 64 real
        acc_fc = acc_fc + jnp.dot(feat, w1_ref[h2],
                                  preferred_element_type=jnp.float32)
    h1 = jnp.maximum(acc_fc + fb1_ref[...], 0.0)               # fc1 + ReLU

    # ---- fc2 -> ReLU -> fc3 (all VMEM-resident) ----
    h2v = jnp.dot(h1.astype(jnp.bfloat16), w2_ref[...],
                  preferred_element_type=jnp.float32)
    h2v = jnp.maximum(h2v + fb2_ref[...], 0.0)
    out = jnp.dot(h2v.astype(jnp.bfloat16), w3_ref[...],
                  preferred_element_type=jnp.float32)
    out = out + fb3_ref[...]
    o_ref[...] = out.reshape(1, bt, 128)


def lenet5_forward(kp, x_nchw):
    """x_nchw: (B, 1, 28, 28) f32 -> logits (B, 10) f32, one fused pallas_call."""
    B = x_nchw.shape[0]
    x = x_nchw.reshape(B, 28, 28).astype(jnp.float32)   # Cin=1 -> just squeeze
    bt = _pick_batch_tile(B)
    Bp = _round_up(B, bt)
    if Bp != B:
        x = jnp.pad(x, ((0, Bp - B), (0, 0), (0, 0)))
    grid = Bp // bt

    def whole(a):
        nd = a.ndim
        return pl.BlockSpec(a.shape, lambda i, _nd=nd: (0,) * _nd)

    out = pl.pallas_call(
        _lenet5_kernel,
        out_shape=jax.ShapeDtypeStruct((grid, bt, 128), jnp.float32),
        grid=(grid,),
        in_specs=[
            pl.BlockSpec((bt, 28, 28), lambda i: (i, 0, 0)),
            whole(kp["t1"]), whole(kp["cb1"]),
            whole(kp["t2"]), whole(kp["cb2"]),
            whole(kp["w1"]), whole(kp["fb1"]),
            whole(kp["w2"]), whole(kp["fb2"]),
            whole(kp["w3"]), whole(kp["fb3"]),
        ],
        out_specs=pl.BlockSpec((1, bt, 128), lambda i: (i, 0, 0)),
        scratch_shapes=[
            pltpu.VMEM((bt * 24, 128), jnp.float32),    # s1: conv1 H-pool staging
            pltpu.VMEM((bt, 12, 128), jnp.bfloat16),    # p1: pool1 output
            pltpu.VMEM((bt * 8, 128), jnp.float32),     # s2: conv2 H-pool staging
        ],
        compiler_params=pltpu.CompilerParams(
            dimension_semantics=("parallel",),
            vmem_limit_bytes=VMEM_LIMIT,
        ),
    )(x, kp["t1"], kp["cb1"], kp["t2"], kp["cb2"],
      kp["w1"], kp["fb1"], kp["w2"], kp["fb2"], kp["w3"], kp["fb3"])

    return out.reshape(Bp, 128)[:B, :10]


# ----------------------------------------------------------------------------
# Parameters: PyTorch-layout init + one-time kernel-layout preparation
# ----------------------------------------------------------------------------
def init_params(key):
    keys = jax.random.split(key, 10)
    s = 0.1
    return {
        "conv1_w": jax.random.normal(keys[0], (6, 1, 5, 5), jnp.float32) * s,
        "conv1_b": jax.random.normal(keys[1], (6,), jnp.float32) * s,
        "conv2_w": jax.random.normal(keys[2], (16, 6, 5, 5), jnp.float32) * s,
        "conv2_b": jax.random.normal(keys[3], (16,), jnp.float32) * s,
        "fc1_w": jax.random.normal(keys[4], (120, 256), jnp.float32) * s,
        "fc1_b": jax.random.normal(keys[5], (120,), jnp.float32) * s,
        "fc2_w": jax.random.normal(keys[6], (84, 120), jnp.float32) * s,
        "fc2_b": jax.random.normal(keys[7], (84,), jnp.float32) * s,
        "fc3_w": jax.random.normal(keys[8], (10, 84), jnp.float32) * s,
        "fc3_b": jax.random.normal(keys[9], (10,), jnp.float32) * s,
    }


def prepare_params(params):
    """One-time (host-side) layout prep into banded-Toeplitz / padded bf16."""
    w1c = np.asarray(params["conv1_w"], np.float32)   # (6, 1, 5, 5)
    b1c = np.asarray(params["conv1_b"], np.float32)
    w2c = np.asarray(params["conv2_w"], np.float32)   # (16, 6, 5, 5)
    b2c = np.asarray(params["conv2_b"], np.float32)

    # conv1 Toeplitz: out[b,h,w,c] = sum_{i,win} x[b,h+i,win] * t1[i, win, lane(w,c)]
    # lane(w, c) = wp*128 + c*12 + w2   with w = 2*w2 + wp   (parity-split W-pool)
    t1 = np.zeros((5, 28, 256), np.float32)
    cb1 = np.zeros((1, 256), np.float32)
    for c in range(6):
        for w in range(24):
            w2, wp = w // 2, w % 2
            lane = wp * 128 + c * 12 + w2
            cb1[0, lane] = b1c[c]
            for i in range(5):
                for j in range(5):
                    t1[i, w + j, lane] = w1c[c, 0, i, j]

    # conv2 Toeplitz over pool1's planar layout (input lane = ci*12 + win):
    # out lane(w, co) = wp*128 + co*4 + w2  with w = 2*w2 + wp
    t2 = np.zeros((5, 128, 256), np.float32)
    cb2 = np.zeros((1, 256), np.float32)
    for co in range(16):
        for wo in range(8):
            w2o, wp = wo // 2, wo % 2
            lane = wp * 128 + co * 4 + w2o
            cb2[0, lane] = b2c[co]
            for ci in range(6):
                for i in range(5):
                    for j in range(5):
                        t2[i, ci * 12 + wo + j, lane] = w2c[co, ci, i, j]

    # fc1: split PyTorch's (n, co*16 + h2*4 + w2) layout by pooled row h2 so the
    # kernel contracts only the 4 x 64 real features (kernel lane = co*4 + w2).
    fc1_w = np.asarray(params["fc1_w"], np.float32)               # (120, 256)
    w1 = fc1_w.reshape(120, 16, 4, 4).transpose(2, 1, 3, 0)       # (h2, co, w2, n)
    w1 = w1.reshape(4, 64, 120)
    w1p = np.zeros((4, 128, 128), np.float32)
    w1p[:, :64, :120] = w1

    def pad2(a, r=128, c=128):
        out = np.zeros((r, c), np.float32)
        out[:a.shape[0], :a.shape[1]] = a
        return out

    def brow(b, n=128):
        r = np.zeros((1, n), np.float32)
        r[0, :b.shape[0]] = np.asarray(b, np.float32)
        return r

    return {
        "t1": jnp.asarray(t1, jnp.bfloat16),
        "cb1": jnp.asarray(cb1, jnp.float32),
        "t2": jnp.asarray(t2, jnp.bfloat16),
        "cb2": jnp.asarray(cb2, jnp.float32),
        "w1": jnp.asarray(w1p, jnp.bfloat16),
        "fb1": jnp.asarray(brow(params["fc1_b"]), jnp.float32),
        "w2": jnp.asarray(pad2(np.asarray(params["fc2_w"], np.float32).T), jnp.bfloat16),
        "fb2": jnp.asarray(brow(params["fc2_b"]), jnp.float32),
        "w3": jnp.asarray(pad2(np.asarray(params["fc3_w"], np.float32).T), jnp.bfloat16),
        "fb3": jnp.asarray(brow(params["fc3_b"]), jnp.float32),
    }


# ----------------------------------------------------------------------------
# Pure-XLA f32 reference (PyTorch-layout params) used only as a sanity check.
# ----------------------------------------------------------------------------
def lenet5_reference(params, x):
    def conv(x, w, b):
        y = jax.lax.conv_general_dilated(
            x, w, (1, 1), "VALID", dimension_numbers=("NCHW", "OIHW", "NCHW"))
        return jax.nn.relu(y + b[None, :, None, None])

    def pool(x):
        B, C, H, W = x.shape
        return jnp.max(x.reshape(B, C, H // 2, 2, W // 2, 2), axis=(3, 5))

    x = pool(conv(x, params["conv1_w"], params["conv1_b"]))
    x = pool(conv(x, params["conv2_w"], params["conv2_b"]))
    x = x.reshape(x.shape[0], -1)
    x = jax.nn.relu(x @ params["fc1_w"].T + params["fc1_b"])
    x = jax.nn.relu(x @ params["fc2_w"].T + params["fc2_b"])
    return x @ params["fc3_w"].T + params["fc3_b"]


if __name__ == "__main__":
    key = jax.random.PRNGKey(0)
    pkey, xkey = jax.random.split(key)
    params = init_params(pkey)
    kparams = prepare_params(params)

    # LeNet-5 geometry requires 28x28 single-channel inputs (fc1 expects 16*4*4).
    x = jax.random.normal(xkey, (2, 1, 28, 28), jnp.float32)

    logits = jax.jit(lenet5_forward)(kparams, x)
    jax.block_until_ready(logits)
    assert logits.shape == (2, 10) and logits.dtype == jnp.float32

    # Loose tripwire vs f32 XLA reference (kernel uses bf16 matmuls w/ f32 acc).
    ref = jax.jit(lenet5_reference)(params, x)
    max_diff = float(jnp.max(jnp.abs(logits - ref)))
    assert max_diff < 0.2, f"mismatch vs reference: {max_diff}"

    print("KERNEL_OK")
</pallas_src>

<mosaic_0001>
module attributes {stable_mosaic.version = 11 : i64} {
  func.func @_lenet5_kernel(%arg0: i32, %arg1: memref<1x28x28xf32, #tpu.memory_space<vmem>>, %arg2: memref<5x28x256xbf16, #tpu.memory_space<vmem>>, %arg3: memref<1x256xf32, #tpu.memory_space<vmem>>, %arg4: memref<5x128x256xbf16, #tpu.memory_space<vmem>>, %arg5: memref<1x256xf32, #tpu.memory_space<vmem>>, %arg6: memref<4x128x128xbf16, #tpu.memory_space<vmem>>, %arg7: memref<1x128xf32, #tpu.memory_space<vmem>>, %arg8: memref<128x128xbf16, #tpu.memory_space<vmem>>, %arg9: memref<1x128xf32, #tpu.memory_space<vmem>>, %arg10: memref<128x128xbf16, #tpu.memory_space<vmem>>, %arg11: memref<1x128xf32, #tpu.memory_space<vmem>>, %arg12: memref<1x1x128xf32, #tpu.memory_space<vmem>>, %arg13: memref<24x128xf32, #tpu.memory_space<vmem>>, %arg14: memref<1x12x128xbf16, #tpu.memory_space<vmem>>, %arg15: memref<8x128xf32, #tpu.memory_space<vmem>>) attributes {dimension_semantics = [#tpu.dimension_semantics<parallel>], iteration_bounds = array<i64: 2>, scalar_prefetch = 0 : i64, scratch_operands = 3 : i64, tpu.core_type = #tpu.core_type<tc>, window_params = [{transform_indices = @transform_0, window_bounds = array<i64: 1, 28, 28>}, {pipeline_mode = #tpu.pipeline_mode<synchronous>, transform_indices = @transform_1, window_bounds = array<i64: 5, 28, 256>}, {pipeline_mode = #tpu.pipeline_mode<synchronous>, transform_indices = @transform_2, window_bounds = array<i64: 1, 256>}, {pipeline_mode = #tpu.pipeline_mode<synchronous>, transform_indices = @transform_3, window_bounds = array<i64: 5, 128, 256>}, {pipeline_mode = #tpu.pipeline_mode<synchronous>, transform_indices = @transform_4, window_bounds = array<i64: 1, 256>}, {pipeline_mode = #tpu.pipeline_mode<synchronous>, transform_indices = @transform_5, window_bounds = array<i64: 4, 128, 128>}, {pipeline_mode = #tpu.pipeline_mode<synchronous>, transform_indices = @transform_6, window_bounds = array<i64: 1, 128>}, {pipeline_mode = #tpu.pipeline_mode<synchronous>, transform_indices = @transform_7, window_bounds = array<i64: 128, 128>}, {pipeline_mode = #tpu.pipeline_mode<synchronous>, transform_indices = @transform_8, window_bounds = array<i64: 1, 128>}, {pipeline_mode = #tpu.pipeline_mode<synchronous>, transform_indices = @transform_9, window_bounds = array<i64: 128, 128>}, {pipeline_mode = #tpu.pipeline_mode<synchronous>, transform_indices = @transform_10, window_bounds = array<i64: 1, 128>}, {transform_indices = @transform_11, window_bounds = array<i64: 1, 1, 128>}]} {
    %cst = arith.constant 0.000000e+00 : f32
    %0 = vector.broadcast %cst : f32 to vector<24x256xf32>
    %c0 = arith.constant 0 : index
    %c0_0 = arith.constant 0 : index
    %c0_1 = arith.constant 0 : index
    %1 = vector.load %arg1[%c0, %c0_0, %c0_1] : memref<1x28x28xf32, #tpu.memory_space<vmem>>, vector<1x24x28xf32>
    %2 = arith.truncf %1 : vector<1x24x28xf32> to vector<1x24x28xbf16>
    %3 = vector.shape_cast %2 : vector<1x24x28xbf16> to vector<24x28xbf16>
    %c0_2 = arith.constant 0 : index
    %c0_3 = arith.constant 0 : index
    %c0_4 = arith.constant 0 : index
    %4 = vector.load %arg2[%c0_2, %c0_3, %c0_4] : memref<5x28x256xbf16, #tpu.memory_space<vmem>>, vector<1x28x256xbf16>
    %5 = vector.shape_cast %4 : vector<1x28x256xbf16> to vector<28x256xbf16>
    %cst_5 = arith.constant dense<0.000000e+00> : vector<24x256xf32>
    %6 = tpu.matmul %3, %5, %cst_5 {dimension_numbers = #tpu.dot_dimension_numbers<[1], [0], [0], [1], [0, 0, 1, 1], [], []>} : vector<24x28xbf16>, vector<28x256xbf16>, vector<24x256xf32> -> vector<24x256xf32>
    %7 = arith.addf %0, %6 : vector<24x256xf32>
    %c0_6 = arith.constant 0 : index
    %c1 = arith.constant 1 : index
    %c0_7 = arith.constant 0 : index
    %8 = vector.load %arg1[%c0_6, %c1, %c0_7] : memref<1x28x28xf32, #tpu.memory_space<vmem>>, vector<1x24x28xf32>
    %9 = arith.truncf %8 : vector<1x24x28xf32> to vector<1x24x28xbf16>
    %10 = vector.shape_cast %9 : vector<1x24x28xbf16> to vector<24x28xbf16>
    %c1_8 = arith.constant 1 : index
    %c0_9 = arith.constant 0 : index
    %c0_10 = arith.constant 0 : index
    %11 = vector.load %arg2[%c1_8, %c0_9, %c0_10] : memref<5x28x256xbf16, #tpu.memory_space<vmem>>, vector<1x28x256xbf16>
    %12 = vector.shape_cast %11 : vector<1x28x256xbf16> to vector<28x256xbf16>
    %cst_11 = arith.constant dense<0.000000e+00> : vector<24x256xf32>
    %13 = tpu.matmul %10, %12, %cst_11 {dimension_numbers = #tpu.dot_dimension_numbers<[1], [0], [0], [1], [0, 0, 1, 1], [], []>} : vector<24x28xbf16>, vector<28x256xbf16>, vector<24x256xf32> -> vector<24x256xf32>
    %14 = arith.addf %7, %13 : vector<24x256xf32>
    %c0_12 = arith.constant 0 : index
    %c2 = arith.constant 2 : index
    %c0_13 = arith.constant 0 : index
    %15 = vector.load %arg1[%c0_12, %c2, %c0_13] : memref<1x28x28xf32, #tpu.memory_space<vmem>>, vector<1x24x28xf32>
    %16 = arith.truncf %15 : vector<1x24x28xf32> to vector<1x24x28xbf16>
    %17 = vector.shape_cast %16 : vector<1x24x28xbf16> to vector<24x28xbf16>
    %c2_14 = arith.constant 2 : index
    %c0_15 = arith.constant 0 : index
    %c0_16 = arith.constant 0 : index
    %18 = vector.load %arg2[%c2_14, %c0_15, %c0_16] : memref<5x28x256xbf16, #tpu.memory_space<vmem>>, vector<1x28x256xbf16>
    %19 = vector.shape_cast %18 : vector<1x28x256xbf16> to vector<28x256xbf16>
    %cst_17 = arith.constant dense<0.000000e+00> : vector<24x256xf32>
    %20 = tpu.matmul %17, %19, %cst_17 {dimension_numbers = #tpu.dot_dimension_numbers<[1], [0], [0], [1], [0, 0, 1, 1], [], []>} : vector<24x28xbf16>, vector<28x256xbf16>, vector<24x256xf32> -> vector<24x256xf32>
    %21 = arith.addf %14, %20 : vector<24x256xf32>
    %c0_18 = arith.constant 0 : index
    %c3 = arith.constant 3 : index
    %c0_19 = arith.constant 0 : index
    %22 = vector.load %arg1[%c0_18, %c3, %c0_19] : memref<1x28x28xf32, #tpu.memory_space<vmem>>, vector<1x24x28xf32>
    %23 = arith.truncf %22 : vector<1x24x28xf32> to vector<1x24x28xbf16>
    %24 = vector.shape_cast %23 : vector<1x24x28xbf16> to vector<24x28xbf16>
    %c3_20 = arith.constant 3 : index
    %c0_21 = arith.constant 0 : index
    %c0_22 = arith.constant 0 : index
    %25 = vector.load %arg2[%c3_20, %c0_21, %c0_22] : memref<5x28x256xbf16, #tpu.memory_space<vmem>>, vector<1x28x256xbf16>
    %26 = vector.shape_cast %25 : vector<1x28x256xbf16> to vector<28x256xbf16>
    %cst_23 = arith.constant dense<0.000000e+00> : vector<24x256xf32>
    %27 = tpu.matmul %24, %26, %cst_23 {dimension_numbers = #tpu.dot_dimension_numbers<[1], [0], [0], [1], [0, 0, 1, 1], [], []>} : vector<24x28xbf16>, vector<28x256xbf16>, vector<24x256xf32> -> vector<24x256xf32>
    %28 = arith.addf %21, %27 : vector<24x256xf32>
    %c0_24 = arith.constant 0 : index
    %c4 = arith.constant 4 : index
    %c0_25 = arith.constant 0 : index
    %29 = vector.load %arg1[%c0_24, %c4, %c0_25] : memref<1x28x28xf32, #tpu.memory_space<vmem>>, vector<1x24x28xf32>
    %30 = arith.truncf %29 : vector<1x24x28xf32> to vector<1x24x28xbf16>
    %31 = vector.shape_cast %30 : vector<1x24x28xbf16> to vector<24x28xbf16>
    %c4_26 = arith.constant 4 : index
    %c0_27 = arith.constant 0 : index
    %c0_28 = arith.constant 0 : index
    %32 = vector.load %arg2[%c4_26, %c0_27, %c0_28] : memref<5x28x256xbf16, #tpu.memory_space<vmem>>, vector<1x28x256xbf16>
    %33 = vector.shape_cast %32 : vector<1x28x256xbf16> to vector<28x256xbf16>
    %cst_29 = arith.constant dense<0.000000e+00> : vector<24x256xf32>
    %34 = tpu.matmul %31, %33, %cst_29 {dimension_numbers = #tpu.dot_dimension_numbers<[1], [0], [0], [1], [0, 0, 1, 1], [], []>} : vector<24x28xbf16>, vector<28x256xbf16>, vector<24x256xf32> -> vector<24x256xf32>
    %35 = arith.addf %28, %34 : vector<24x256xf32>
    %c0_30 = arith.constant 0 : index
    %c0_31 = arith.constant 0 : index
    %36 = vector.load %arg3[%c0_30, %c0_31] : memref<1x256xf32, #tpu.memory_space<vmem>>, vector<1x256xf32>
    %37 = vector.broadcast %36 : vector<1x256xf32> to vector<24x256xf32>
    %38 = arith.addf %35, %37 : vector<24x256xf32>
    %cst_32 = arith.constant 0.000000e+00 : f32
    %39 = vector.broadcast %cst_32 : f32 to vector<24x256xf32>
    %40 = arith.maximumf %38, %39 : vector<24x256xf32>
    %41 = vector.extract_strided_slice %40 {offsets = [0, 0], sizes = [24, 128], strides = [1, 1]} : vector<24x256xf32> to vector<24x128xf32>
    %42 = vector.extract_strided_slice %40 {offsets = [0, 128], sizes = [24, 128], strides = [1, 1]} : vector<24x256xf32> to vector<24x128xf32>
    %43 = arith.maximumf %41, %42 : vector<24x128xf32>
    %c0_33 = arith.constant 0 : index
    %c0_34 = arith.constant 0 : index
    %44 = vector.load %arg13[%c0_33, %c0_34] : memref<24x128xf32, #tpu.memory_space<vmem>>, vector<24x128xf32>
    tpu.vector_store %arg13[%c0_33, %c0_34], %43 {strides = array<i32>} : memref<24x128xf32, #tpu.memory_space<vmem>>, vector<24x128xf32>,
    %c0_35 = arith.constant 0 : index
    %c0_36 = arith.constant 0 : index
    %45 = tpu.strided_load %arg13[%c0_35, %c0_36] {strides = array<i32: 2, 1>} : memref<24x128xf32, #tpu.memory_space<vmem>>, vector<12x128xf32>
    %c1_37 = arith.constant 1 : index
    %c0_38 = arith.constant 0 : index
    %46 = tpu.strided_load %arg13[%c1_37, %c0_38] {strides = array<i32: 2, 1>} : memref<24x128xf32, #tpu.memory_space<vmem>>, vector<12x128xf32>
    %47 = arith.maximumf %45, %46 : vector<12x128xf32>
    %48 = arith.truncf %47 : vector<12x128xf32> to vector<12x128xbf16>
    %49 = vector.shape_cast %48 : vector<12x128xbf16> to vector<1x12x128xbf16>
    %c0_39 = arith.constant 0 : index
    %c0_40 = arith.constant 0 : index
    %c0_41 = arith.constant 0 : index
    %50 = vector.load %arg14[%c0_39, %c0_40, %c0_41] : memref<1x12x128xbf16, #tpu.memory_space<vmem>>, vector<1x12x128xbf16>
    tpu.vector_store %arg14[%c0_39, %c0_40, %c0_41], %49 {strides = array<i32>} : memref<1x12x128xbf16, #tpu.memory_space<vmem>>, vector<1x12x128xbf16>,
    %cst_42 = arith.constant 0.000000e+00 : f32
    %51 = vector.broadcast %cst_42 : f32 to vector<8x256xf32>
    %c0_43 = arith.constant 0 : index
    %c0_44 = arith.constant 0 : index
    %c0_45 = arith.constant 0 : index
    %52 = vector.load %arg14[%c0_43, %c0_44, %c0_45] : memref<1x12x128xbf16, #tpu.memory_space<vmem>>, vector<1x8x128xbf16>
    %53 = vector.shape_cast %52 : vector<1x8x128xbf16> to vector<8x128xbf16>
    %c0_46 = arith.constant 0 : index
    %c0_47 = arith.constant 0 : index
    %c0_48 = arith.constant 0 : index
    %54 = vector.load %arg4[%c0_46, %c0_47, %c0_48] : memref<5x128x256xbf16, #tpu.memory_space<vmem>>, vector<1x128x256xbf16>
    %55 = vector.shape_cast %54 : vector<1x128x256xbf16> to vector<128x256xbf16>
    %cst_49 = arith.constant dense<0.000000e+00> : vector<8x256xf32>
    %56 = tpu.matmul %53, %55, %cst_49 {dimension_numbers = #tpu.dot_dimension_numbers<[1], [0], [0], [1], [0, 0, 1, 1], [], []>} : vector<8x128xbf16>, vector<128x256xbf16>, vector<8x256xf32> -> vector<8x256xf32>
    %57 = arith.addf %51, %56 : vector<8x256xf32>
    %c0_50 = arith.constant 0 : index
    %c1_51 = arith.constant 1 : index
    %c0_52 = arith.constant 0 : index
    %58 = vector.load %arg14[%c0_50, %c1_51, %c0_52] : memref<1x12x128xbf16, #tpu.memory_space<vmem>>, vector<1x8x128xbf16>
    %59 = vector.shape_cast %58 : vector<1x8x128xbf16> to vector<8x128xbf16>
    %c1_53 = arith.constant 1 : index
    %c0_54 = arith.constant 0 : index
    %c0_55 = arith.constant 0 : index
    %60 = vector.load %arg4[%c1_53, %c0_54, %c0_55] : memref<5x128x256xbf16, #tpu.memory_space<vmem>>, vector<1x128x256xbf16>
    %61 = vector.shape_cast %60 : vector<1x128x256xbf16> to vector<128x256xbf16>
    %cst_56 = arith.constant dense<0.000000e+00> : vector<8x256xf32>
    %62 = tpu.matmul %59, %61, %cst_56 {dimension_numbers = #tpu.dot_dimension_numbers<[1], [0], [0], [1], [0, 0, 1, 1], [], []>} : vector<8x128xbf16>, vector<128x256xbf16>, vector<8x256xf32> -> vector<8x256xf32>
    %63 = arith.addf %57, %62 : vector<8x256xf32>
    %c0_57 = arith.constant 0 : index
    %c2_58 = arith.constant 2 : index
    %c0_59 = arith.constant 0 : index
    %64 = vector.load %arg14[%c0_57, %c2_58, %c0_59] : memref<1x12x128xbf16, #tpu.memory_space<vmem>>, vector<1x8x128xbf16>
    %65 = vector.shape_cast %64 : vector<1x8x128xbf16> to vector<8x128xbf16>
    %c2_60 = arith.constant 2 : index
    %c0_61 = arith.constant 0 : index
    %c0_62 = arith.constant 0 : index
    %66 = vector.load %arg4[%c2_60, %c0_61, %c0_62] : memref<5x128x256xbf16, #tpu.memory_space<vmem>>, vector<1x128x256xbf16>
    %67 = vector.shape_cast %66 : vector<1x128x256xbf16> to vector<128x256xbf16>
    %cst_63 = arith.constant dense<0.000000e+00> : vector<8x256xf32>
    %68 = tpu.matmul %65, %67, %cst_63 {dimension_numbers = #tpu.dot_dimension_numbers<[1], [0], [0], [1], [0, 0, 1, 1], [], []>} : vector<8x128xbf16>, vector<128x256xbf16>, vector<8x256xf32> -> vector<8x256xf32>
    %69 = arith.addf %63, %68 : vector<8x256xf32>
    %c0_64 = arith.constant 0 : index
    %c3_65 = arith.constant 3 : index
    %c0_66 = arith.constant 0 : index
    %70 = vector.load %arg14[%c0_64, %c3_65, %c0_66] : memref<1x12x128xbf16, #tpu.memory_space<vmem>>, vector<1x8x128xbf16>
    %71 = vector.shape_cast %70 : vector<1x8x128xbf16> to vector<8x128xbf16>
    %c3_67 = arith.constant 3 : index
    %c0_68 = arith.constant 0 : index
    %c0_69 = arith.constant 0 : index
    %72 = vector.load %arg4[%c3_67, %c0_68, %c0_69] : memref<5x128x256xbf16, #tpu.memory_space<vmem>>, vector<1x128x256xbf16>
    %73 = vector.shape_cast %72 : vector<1x128x256xbf16> to vector<128x256xbf16>
    %cst_70 = arith.constant dense<0.000000e+00> : vector<8x256xf32>
    %74 = tpu.matmul %71, %73, %cst_70 {dimension_numbers = #tpu.dot_dimension_numbers<[1], [0], [0], [1], [0, 0, 1, 1], [], []>} : vector<8x128xbf16>, vector<128x256xbf16>, vector<8x256xf32> -> vector<8x256xf32>
    %75 = arith.addf %69, %74 : vector<8x256xf32>
    %c0_71 = arith.constant 0 : index
    %c4_72 = arith.constant 4 : index
    %c0_73 = arith.constant 0 : index
    %76 = vector.load %arg14[%c0_71, %c4_72, %c0_73] : memref<1x12x128xbf16, #tpu.memory_space<vmem>>, vector<1x8x128xbf16>
    %77 = vector.shape_cast %76 : vector<1x8x128xbf16> to vector<8x128xbf16>
    %c4_74 = arith.constant 4 : index
    %c0_75 = arith.constant 0 : index
    %c0_76 = arith.constant 0 : index
    %78 = vector.load %arg4[%c4_74, %c0_75, %c0_76] : memref<5x128x256xbf16, #tpu.memory_space<vmem>>, vector<1x128x256xbf16>
    %79 = vector.shape_cast %78 : vector<1x128x256xbf16> to vector<128x256xbf16>
    %cst_77 = arith.constant dense<0.000000e+00> : vector<8x256xf32>
    %80 = tpu.matmul %77, %79, %cst_77 {dimension_numbers = #tpu.dot_dimension_numbers<[1], [0], [0], [1], [0, 0, 1, 1], [], []>} : vector<8x128xbf16>, vector<128x256xbf16>, vector<8x256xf32> -> vector<8x256xf32>
    %81 = arith.addf %75, %80 : vector<8x256xf32>
    %c0_78 = arith.constant 0 : index
    %c0_79 = arith.constant 0 : index
    %82 = vector.load %arg5[%c0_78, %c0_79] : memref<1x256xf32, #tpu.memory_space<vmem>>, vector<1x256xf32>
    %83 = vector.broadcast %82 : vector<1x256xf32> to vector<8x256xf32>
    %84 = arith.addf %81, %83 : vector<8x256xf32>
    %cst_80 = arith.constant 0.000000e+00 : f32
    %85 = vector.broadcast %cst_80 : f32 to vector<8x256xf32>
    %86 = arith.maximumf %84, %85 : vector<8x256xf32>
    %87 = vector.extract_strided_slice %86 {offsets = [0, 0], sizes = [8, 128], strides = [1, 1]} : vector<8x256xf32> to vector<8x128xf32>
    %88 = vector.extract_strided_slice %86 {offsets = [0, 128], sizes = [8, 128], strides = [1, 1]} : vector<8x256xf32> to vector<8x128xf32>
    %89 = arith.maximumf %87, %88 : vector<8x128xf32>
    %c0_81 = arith.constant 0 : index
    %c0_82 = arith.constant 0 : index
    %90 = vector.load %arg15[%c0_81, %c0_82] : memref<8x128xf32, #tpu.memory_space<vmem>>, vector<8x128xf32>
    tpu.vector_store %arg15[%c0_81, %c0_82], %89 {strides = array<i32>} : memref<8x128xf32, #tpu.memory_space<vmem>>, vector<8x128xf32>,
    %cst_83 = arith.constant 0.000000e+00 : f32
    %91 = vector.broadcast %cst_83 : f32 to vector<1x128xf32>
    %c0_84 = arith.constant 0 : index
    %c0_85 = arith.constant 0 : index
    %92 = tpu.strided_load %arg15[%c0_84, %c0_85] {strides = array<i32: 8, 1>} : memref<8x128xf32, #tpu.memory_space<vmem>>, vector<1x128xf32>
    %c1_86 = arith.constant 1 : index
    %c0_87 = arith.constant 0 : index
    %93 = tpu.strided_load %arg15[%c1_86, %c0_87] {strides = array<i32: 8, 1>} : memref<8x128xf32, #tpu.memory_space<vmem>>, vector<1x128xf32>
    %94 = arith.maximumf %92, %93 : vector<1x128xf32>
    %95 = arith.truncf %94 : vector<1x128xf32> to vector<1x128xbf16>
    %c0_88 = arith.constant 0 : index
    %c0_89 = arith.constant 0 : index
    %c0_90 = arith.constant 0 : index
    %96 = vector.load %arg6[%c0_88, %c0_89, %c0_90] : memref<4x128x128xbf16, #tpu.memory_space<vmem>>, vector<1x128x128xbf16>
    %97 = vector.shape_cast %96 : vector<1x128x128xbf16> to vector<128x128xbf16>
    %cst_91 = arith.constant dense<0.000000e+00> : vector<1x128xf32>
    %98 = tpu.matmul %95, %97, %cst_91 {dimension_numbers = #tpu.dot_dimension_numbers<[1], [0], [0], [1], [0, 0, 1, 1], [], []>} : vector<1x128xbf16>, vector<128x128xbf16>, vector<1x128xf32> -> vector<1x128xf32>
    %99 = arith.addf %91, %98 : vector<1x128xf32>
    %c2_92 = arith.constant 2 : index
    %c0_93 = arith.constant 0 : index
    %100 = tpu.strided_load %arg15[%c2_92, %c0_93] {strides = array<i32: 8, 1>} : memref<8x128xf32, #tpu.memory_space<vmem>>, vector<1x128xf32>
    %c3_94 = arith.constant 3 : index
    %c0_95 = arith.constant 0 : index
    %101 = tpu.strided_load %arg15[%c3_94, %c0_95] {strides = array<i32: 8, 1>} : memref<8x128xf32, #tpu.memory_space<vmem>>, vector<1x128xf32>
    %102 = arith.maximumf %100, %101 : vector<1x128xf32>
    %103 = arith.truncf %102 : vector<1x128xf32> to vector<1x128xbf16>
    %c1_96 = arith.constant 1 : index
    %c0_97 = arith.constant 0 : index
    %c0_98 = arith.constant 0 : index
    %104 = vector.load %arg6[%c1_96, %c0_97, %c0_98] : memref<4x128x128xbf16, #tpu.memory_space<vmem>>, vector<1x128x128xbf16>
    %105 = vector.shape_cast %104 : vector<1x128x128xbf16> to vector<128x128xbf16>
    %cst_99 = arith.constant dense<0.000000e+00> : vector<1x128xf32>
    %106 = tpu.matmul %103, %105, %cst_99 {dimension_numbers = #tpu.dot_dimension_numbers<[1], [0], [0], [1], [0, 0, 1, 1], [], []>} : vector<1x128xbf16>, vector<128x128xbf16>, vector<1x128xf32> -> vector<1x128xf32>
    %107 = arith.addf %99, %106 : vector<1x128xf32>
    %c4_100 = arith.constant 4 : index
    %c0_101 = arith.constant 0 : index
    %108 = tpu.strided_load %arg15[%c4_100, %c0_101] {strides = array<i32: 8, 1>} : memref<8x128xf32, #tpu.memory_space<vmem>>, vector<1x128xf32>
    %c5 = arith.constant 5 : index
    %c0_102 = arith.constant 0 : index
    %109 = tpu.strided_load %arg15[%c5, %c0_102] {strides = array<i32: 8, 1>} : memref<8x128xf32, #tpu.memory_space<vmem>>, vector<1x128xf32>
    %110 = arith.maximumf %108, %109 : vector<1x128xf32>
    %111 = arith.truncf %110 : vector<1x128xf32> to vector<1x128xbf16>
    %c2_103 = arith.constant 2 : index
    %c0_104 = arith.constant 0 : index
    %c0_105 = arith.constant 0 : index
    %112 = vector.load %arg6[%c2_103, %c0_104, %c0_105] : memref<4x128x128xbf16, #tpu.memory_space<vmem>>, vector<1x128x128xbf16>
    %113 = vector.shape_cast %112 : vector<1x128x128xbf16> to vector<128x128xbf16>
    %cst_106 = arith.constant dense<0.000000e+00> : vector<1x128xf32>
    %114 = tpu.matmul %111, %113, %cst_106 {dimension_numbers = #tpu.dot_dimension_numbers<[1], [0], [0], [1], [0, 0, 1, 1], [], []>} : vector<1x128xbf16>, vector<128x128xbf16>, vector<1x128xf32> -> vector<1x128xf32>
    %115 = arith.addf %107, %114 : vector<1x128xf32>
    %c6 = arith.constant 6 : index
    %c0_107 = arith.constant 0 : index
    %116 = tpu.strided_load %arg15[%c6, %c0_107] {strides = array<i32: 8, 1>} : memref<8x128xf32, #tpu.memory_space<vmem>>, vector<1x128xf32>
    %c7 = arith.constant 7 : index
    %c0_108 = arith.constant 0 : index
    %117 = tpu.strided_load %arg15[%c7, %c0_108] {strides = array<i32: 8, 1>} : memref<8x128xf32, #tpu.memory_space<vmem>>, vector<1x128xf32>
    %118 = arith.maximumf %116, %117 : vector<1x128xf32>
    %119 = arith.truncf %118 : vector<1x128xf32> to vector<1x128xbf16>
    %c3_109 = arith.constant 3 : index
    %c0_110 = arith.constant 0 : index
    %c0_111 = arith.constant 0 : index
    %120 = vector.load %arg6[%c3_109, %c0_110, %c0_111] : memref<4x128x128xbf16, #tpu.memory_space<vmem>>, vector<1x128x128xbf16>
    %121 = vector.shape_cast %120 : vector<1x128x128xbf16> to vector<128x128xbf16>
    %cst_112 = arith.constant dense<0.000000e+00> : vector<1x128xf32>
    %122 = tpu.matmul %119, %121, %cst_112 {dimension_numbers = #tpu.dot_dimension_numbers<[1], [0], [0], [1], [0, 0, 1, 1], [], []>} : vector<1x128xbf16>, vector<128x128xbf16>, vector<1x128xf32> -> vector<1x128xf32>
    %123 = arith.addf %115, %122 : vector<1x128xf32>
    %c0_113 = arith.constant 0 : index
    %c0_114 = arith.constant 0 : index
    %124 = vector.load %arg7[%c0_113, %c0_114] : memref<1x128xf32, #tpu.memory_space<vmem>>, vector<1x128xf32>
    %125 = arith.addf %123, %124 : vector<1x128xf32>
    %cst_115 = arith.constant 0.000000e+00 : f32
    %126 = vector.broadcast %cst_115 : f32 to vector<1x128xf32>
    %127 = arith.maximumf %125, %126 : vector<1x128xf32>
    %128 = arith.truncf %127 : vector<1x128xf32> to vector<1x128xbf16>
    %c0_116 = arith.constant 0 : index
    %c0_117 = arith.constant 0 : index
    %129 = vector.load %arg8[%c0_116, %c0_117] : memref<128x128xbf16, #tpu.memory_space<vmem>>, vector<128x128xbf16>
    %cst_118 = arith.constant dense<0.000000e+00> : vector<1x128xf32>
    %130 = tpu.matmul %128, %129, %cst_118 {dimension_numbers = #tpu.dot_dimension_numbers<[1], [0], [0], [1], [0, 0, 1, 1], [], []>} : vector<1x128xbf16>, vector<128x128xbf16>, vector<1x128xf32> -> vector<1x128xf32>
    %c0_119 = arith.constant 0 : index
    %c0_120 = arith.constant 0 : index
    %131 = vector.load %arg9[%c0_119, %c0_120] : memref<1x128xf32, #tpu.memory_space<vmem>>, vector<1x128xf32>
    %132 = arith.addf %130, %131 : vector<1x128xf32>
    %cst_121 = arith.constant 0.000000e+00 : f32
    %133 = vector.broadcast %cst_121 : f32 to vector<1x128xf32>
    %134 = arith.maximumf %132, %133 : vector<1x128xf32>
    %135 = arith.truncf %134 : vector<1x128xf32> to vector<1x128xbf16>
    %c0_122 = arith.constant 0 : index
    %c0_123 = arith.constant 0 : index
    %136 = vector.load %arg10[%c0_122, %c0_123] : memref<128x128xbf16, #tpu.memory_space<vmem>>, vector<128x128xbf16>
    %cst_124 = arith.constant dense<0.000000e+00> : vector<1x128xf32>
    %137 = tpu.matmul %135, %136, %cst_124 {dimension_numbers = #tpu.dot_dimension_numbers<[1], [0], [0], [1], [0, 0, 1, 1], [], []>} : vector<1x128xbf16>, vector<128x128xbf16>, vector<1x128xf32> -> vector<1x128xf32>
    %c0_125 = arith.constant 0 : index
    %c0_126 = arith.constant 0 : index
    %138 = vector.load %arg11[%c0_125, %c0_126] : memref<1x128xf32, #tpu.memory_space<vmem>>, vector<1x128xf32>
    %139 = arith.addf %137, %138 : vector<1x128xf32>
    %140 = vector.shape_cast %139 : vector<1x128xf32> to vector<1x1x128xf32>
    %c0_127 = arith.constant 0 : index
    %c0_128 = arith.constant 0 : index
    %c0_129 = arith.constant 0 : index
    %141 = vector.load %arg12[%c0_127, %c0_128, %c0_129] : memref<1x1x128xf32, #tpu.memory_space<vmem>>, vector<1x1x128xf32>
    tpu.vector_store %arg12[%c0_127, %c0_128, %c0_129], %140 {strides = array<i32>} : memref<1x1x128xf32, #tpu.memory_space<vmem>>, vector<1x1x128xf32>,
    return
  }
  func.func @transform_0(%arg0: i32) -> (i32, i32, i32) {
    %c0_i32 = arith.constant 0 : i32
    %c0_i32_0 = arith.constant 0 : i32
    %c0_i32_1 = arith.constant 0 : i32
    return %arg0, %c0_i32, %c0_i32_0 : i32, i32, i32
  }
  func.func @transform_1(%arg0: i32) -> (i32, i32, i32) {
    %c0_i32 = arith.constant 0 : i32
    %c0_i32_0 = arith.constant 0 : i32
    %c0_i32_1 = arith.constant 0 : i32
    %c0_i32_2 = arith.constant 0 : i32
    return %c0_i32, %c0_i32_0, %c0_i32_1 : i32, i32, i32
  }
  func.func @transform_2(%arg0: i32) -> (i32, i32) {
    %c0_i32 = arith.constant 0 : i32
    %c0_i32_0 = arith.constant 0 : i32
    %c0_i32_1 = arith.constant 0 : i32
    return %c0_i32, %c0_i32_0 : i32, i32
  }
  func.func @transform_3(%arg0: i32) -> (i32, i32, i32) {
    %c0_i32 = arith.constant 0 : i32
    %c0_i32_0 = arith.constant 0 : i32
    %c0_i32_1 = arith.constant 0 : i32
    %c0_i32_2 = arith.constant 0 : i32
    return %c0_i32, %c0_i32_0, %c0_i32_1 : i32, i32, i32
  }
  func.func @transform_4(%arg0: i32) -> (i32, i32) {
    %c0_i32 = arith.constant 0 : i32
    %c0_i32_0 = arith.constant 0 : i32
    %c0_i32_1 = arith.constant 0 : i32
    return %c0_i32, %c0_i32_0 : i32, i32
  }
  func.func @transform_5(%arg0: i32) -> (i32, i32, i32) {
    %c0_i32 = arith.constant 0 : i32
    %c0_i32_0 = arith.constant 0 : i32
    %c0_i32_1 = arith.constant 0 : i32
    %c0_i32_2 = arith.constant 0 : i32
    return %c0_i32, %c0_i32_0, %c0_i32_1 : i32, i32, i32
  }
  func.func @transform_6(%arg0: i32) -> (i32, i32) {
    %c0_i32 = arith.constant 0 : i32
    %c0_i32_0 = arith.constant 0 : i32
    %c0_i32_1 = arith.constant 0 : i32
    return %c0_i32, %c0_i32_0 : i32, i32
  }
  func.func @transform_7(%arg0: i32) -> (i32, i32) {
    %c0_i32 = arith.constant 0 : i32
    %c0_i32_0 = arith.constant 0 : i32
    %c0_i32_1 = arith.constant 0 : i32
    return %c0_i32, %c0_i32_0 : i32, i32
  }
  func.func @transform_8(%arg0: i32) -> (i32, i32) {
    %c0_i32 = arith.constant 0 : i32
    %c0_i32_0 = arith.constant 0 : i32
    %c0_i32_1 = arith.constant 0 : i32
    return %c0_i32, %c0_i32_0 : i32, i32
  }
  func.func @transform_9(%arg0: i32) -> (i32, i32) {
    %c0_i32 = arith.constant 0 : i32
    %c0_i32_0 = arith.constant 0 : i32
    %c0_i32_1 = arith.constant 0 : i32
    return %c0_i32, %c0_i32_0 : i32, i32
  }
  func.func @transform_10(%arg0: i32) -> (i32, i32) {
    %c0_i32 = arith.constant 0 : i32
    %c0_i32_0 = arith.constant 0 : i32
    %c0_i32_1 = arith.constant 0 : i32
    return %c0_i32, %c0_i32_0 : i32, i32
  }
  func.func @transform_11(%arg0: i32) -> (i32, i32, i32) {
    %c0_i32 = arith.constant 0 : i32
    %c0_i32_0 = arith.constant 0 : i32
    %c0_i32_1 = arith.constant 0 : i32
    return %arg0, %c0_i32, %c0_i32_0 : i32, i32, i32
  }
}

</mosaic_0001>

<llo_original>
// kernel: lenet5_forward.1
$region0: #{lenet5_forward.1}
  #allocation0 [shape = 'u32[]', space=smem, size = 0x4, offset = 0x4, fixed_abs, tag = 'smem constant byte address 0x4 - core index']
  #allocation1 [shape = 'u32[144,128]{1,0:T(1,128)}', space=vmem, size = 0x12000, scoped, tag = 'internal scratch']
  #allocation2 [shape = 'f32[24,128]{1,0:T(8,128)}', space=vmem, size = 0x3000, scoped, tag = 'scratch operand']
  #allocation3 [shape = 'bf16[1,12,128]{2,1,0:T(8,128)(2,1)}', space=vmem, size = 0x1000, scoped, tag = 'scratch operand']
  #allocation4 [shape = 'f32[8,128]{1,0:T(8,128)}', space=vmem, size = 0x1000, scoped, tag = 'scratch operand']
  %s0 = inlined_call_operand.vmem [shape: f32[2,28,28], index: 0, kind: input, shape index: {}]
  %s1 = inlined_call_operand.hbm [shape: bf16[5,28,256], index: 1, kind: input, shape index: {}]
  %s2 = inlined_call_operand.vmem [shape: f32[1,256], index: 2, kind: input, shape index: {}]
  %s3 = inlined_call_operand.hbm [shape: bf16[5,128,256], index: 3, kind: input, shape index: {}]
  %s4 = inlined_call_operand.hbm [shape: f32[1,256], index: 4, kind: input, shape index: {}]
  %s5 = inlined_call_operand.vmem [shape: bf16[4,128,128], index: 5, kind: input, shape index: {}]
  %s6 = inlined_call_operand.hbm [shape: f32[1,128], index: 6, kind: input, shape index: {}]
  %s7 = inlined_call_operand.hbm [shape: bf16[128,128], index: 7, kind: input, shape index: {}]
  %s8 = inlined_call_operand.hbm [shape: f32[1,128], index: 8, kind: input, shape index: {}]
  %s9 = inlined_call_operand.hbm [shape: bf16[128,128], index: 9, kind: input, shape index: {}]
  %s10 = inlined_call_operand.hbm [shape: f32[1,128], index: 10, kind: input, shape index: {}]
  %s11 = inlined_call_operand.hbm [shape: f32[2,1,128], index: 11, kind: output, shape index: {}]
  %s12 = sld [smem:[#allocation0]]
  $region109: #{lenet5_forward.1} parent=0
    _
  %s14 = ssub.s32 1, %s12
  %s15 = scalar_select 0, %s14, %s12
  $region1: #{lenet5_forward.1} parent=0
    #allocation5 [shape = 'u8[81920]{0}', space=vmem, size = 0x14000, scoped, tag = 'input window, operand 1, single buffered']
    #allocation6 [shape = 's32[2]{0}', space=sflag, size = 0x8, scoped, tag = 'scoped memory for lenet5_forward.1']
    #allocation7 [shape = 's32[2]{0}', space=sflag, size = 0x8, scoped, tag = 'scoped memory for lenet5_forward.1']
    #allocation8 [shape = 'u8[327680]{0}', space=vmem, size = 0x50000, scoped, tag = 'input window, operand 3, single buffered']
    #allocation9 [shape = 's32[1]{0}', space=sflag, size = 0x4, scoped, tag = 'scoped memory for lenet5_forward.1']
    #allocation10 [shape = 'u8[1024]{0}', space=vmem, size = 0x400, scoped, tag = 'input window, operand 4, single buffered']
    #allocation11 [shape = 'u8[512]{0}', space=vmem, size = 0x400, scoped, tag = 'input window, operand 6, single buffered']
    #allocation12 [shape = 's32[1]{0}', space=sflag, size = 0x4, scoped, tag = 'scoped memory for lenet5_forward.1']
    #allocation13 [shape = 'u8[32768]{0}', space=vmem, size = 0x8000, scoped, tag = 'input window, operand 7, single buffered']
    #allocation14 [shape = 'u8[512]{0}', space=vmem, size = 0x400, scoped, tag = 'input window, operand 8, single buffered']
    #allocation15 [shape = 's32[1]{0}', space=sflag, size = 0x4, scoped, tag = 'scoped memory for lenet5_forward.1']
    #allocation16 [shape = 'u8[32768]{0}', space=vmem, size = 0x8000, scoped, tag = 'input window, operand 9, single buffered']
    #allocation17 [shape = 'u8[512]{0}', space=vmem, size = 0x400, scoped, tag = 'input window, operand 10, single buffered']
    #allocation18 [shape = 's32[1]{0}', space=sflag, size = 0x4, scoped, tag = 'scoped memory for lenet5_forward.1']
    #allocation19 [shape = 'u8[1024]{0}', space=vmem, size = 0x400, scoped, tag = 'output window, operand 0']
    %16 = vsyncpa [#allocation6], 0
    %17 = vsyncpa [#allocation9], 0
    %18 = vsyncpa [#allocation12], 0
    %19 = vsyncpa [#allocation15], 0
    %20 = vsyncpa [#allocation18], 0
    %21 = vsyncpa [#allocation7], 0
    %s22 = scalar_lea.sflag [#allocation7], 1
    %23 = vsyncpa %s22, 0
    loop: start=0, step=1, limit=4
    $region2: #{lenet5_forward.1} parent=1 // loop_pre_header
      _
    $region3: #{lenet5_forward.1} parent=1 // loop_header
      %s25 = sphi 0, %s29
      %p26 = scmp.ge.s32.totalorder %s25, 4
      %s35 = sphi 0, %s37
      %s38 = sphi 0, %s35
      %s39 = sphi 0, %s38
      %s55 = sphi 0, %s39
      %s59 = sphi 0, %s59
      %s61 = sphi 0, %s59
      %s62 = sphi 0, %s61
      %s76 = sphi 0, %s62
      %s80 = sphi 0, %s80
      %s82 = sphi 0, %s80
      %s83 = sphi 0, %s82
      %s97 = sphi 0, %s83
      %s101 = sphi 0, %s101
      %s103 = sphi 0, %s101
      %s104 = sphi 0, %s103
      %s118 = sphi 0, %s104
      %s122 = sphi 0, %s122
      %s124 = sphi 0, %s122
      %s125 = sphi 0, %s124
      %s139 = sphi 0, %s125
      %s143 = sphi 0, %s143
      %s145 = sphi 0, %s143
      %s146 = sphi 0, %s145
      %s160 = sphi 0, %s146
      %s164 = sphi 0, %s164
      %s166 = sphi 0, %s164
      %s167 = sphi 0, %s166
      %s181 = sphi 0, %s167
      %s185 = sphi 0, %s185
      %s187 = sphi 0, %s185
      %s188 = sphi 0, %s187
      %s202 = sphi 0, %s188
      %s206 = sphi 0, %s206
      %s208 = sphi 0, %s206
      %s209 = sphi 0, %s208
      %s223 = sphi 0, %s209
      %s227 = sphi 0, %s227
      %s229 = sphi 0, %s227
      %s230 = sphi 0, %s229
      %s244 = sphi 0, %s230
      %s248 = sphi 0, %s248
      %s250 = sphi 0, %s248
      %s251 = sphi 0, %s250
      %s265 = sphi 0, %s251
      %s271 = sphi 0, %s273
      %s274 = sphi 0, %s271
      %s275 = sphi 0, %s274
      %s291 = sphi 0, %s275
    $region4: #{lenet5_forward.1} parent=1 // loop_header_branch
      %28 = sbr.rel (%p26) target = $region8
    $region5: #{lenet5_forward.1} parent=1 // loop_body
      %s30 = ssub.s32 %s25, 1
      %s31 = ssub.s32 %s25, 2
      %s32 = sadd.s32 %s25, 1
      %s33 = ssub.s32 %s25, %s32
      %p34 = scmp.eq.s32.totalorder %s33, 0
      %s36 = sadd.s32 %s35, 1
      %s37 = scalar_select %p34, %s35, %s36
      %p40 = pneg %p34
      %p41 = scmp.eq.s32.totalorder %s25, 1
      %p42 = por %p40, %p41
      %p43 = scmp.ne.s32.totalorder %s35, %s38
      %p44 = scmp.eq.s32.totalorder %s25, 0
      %p45 = por %p43, %p44
      %p46 = scmp.ne.s32.totalorder %s35, %s38
      %p47 = scmp.eq.s32.totalorder %s30, 1
      %p48 = por %p46, %p47
      %p49 = scmp.ne.s32.totalorder %s38, %s39
      %p50 = scmp.eq.s32.totalorder %s30, 0
      %p51 = por %p49, %p50
      %p52 = scmp.ne.s32.totalorder %s38, %s39
      %p53 = scmp.eq.s32.totalorder %s31, 1
      %p54 = por %p52, %p53
      %p56 = scmp.ne.s32.totalorder %s39, %s55
      %p57 = scmp.eq.s32.totalorder %s31, 0
      %p58 = por %p56, %p57
      %s60 = sadd.s32 %s59, 1
      %p63 = scmp.eq.s32.totalorder %s25, 1
      %p64 = scmp.ne.s32.totalorder %s59, %s61
      %p65 = scmp.eq.s32.totalorder %s25, 0
      %p66 = por %p64, %p65
      %p67 = scmp.ne.s32.totalorder %s59, %s61
      %p68 = scmp.eq.s32.totalorder %s30, 1
      %p69 = por %p67, %p68
      %p70 = scmp.ne.s32.totalorder %s61, %s62
      %p71 = scmp.eq.s32.totalorder %s30, 0
      %p72 = por %p70, %p71
      %p73 = scmp.ne.s32.totalorder %s61, %s62
      %p74 = scmp.eq.s32.totalorder %s31, 1
      %p75 = por %p73, %p74
      %p77 = scmp.ne.s32.totalorder %s62, %s76
      %p78 = scmp.eq.s32.totalorder %s31, 0
      %p79 = por %p77, %p78
      %s81 = sadd.s32 %s80, 1
      %p84 = scmp.eq.s32.totalorder %s25, 1
      %p85 = scmp.ne.s32.totalorder %s80, %s82
      %p86 = scmp.eq.s32.totalorder %s25, 0
      %p87 = por %p85, %p86
      %p88 = scmp.ne.s32.totalorder %s80, %s82
      %p89 = scmp.eq.s32.totalorder %s30, 1
      %p90 = por %p88, %p89
      %p91 = scmp.ne.s32.totalorder %s82, %s83
      %p92 = scmp.eq.s32.totalorder %s30, 0
      %p93 = por %p91, %p92
      %p94 = scmp.ne.s32.totalorder %s82, %s83
      %p95 = scmp.eq.s32.totalorder %s31, 1
      %p96 = por %p94, %p95
      %p98 = scmp.ne.s32.totalorder %s83, %s97
      %p99 = scmp.eq.s32.totalorder %s31, 0
      %p100 = por %p98, %p99
      %s102 = sadd.s32 %s101, 1
      %p105 = scmp.eq.s32.totalorder %s25, 1
      %p106 = scmp.ne.s32.totalorder %s101, %s103
      %p107 = scmp.eq.s32.totalorder %s25, 0
      %p108 = por %p106, %p107
      %p109 = scmp.ne.s32.totalorder %s101, %s103
      %p110 = scmp.eq.s32.totalorder %s30, 1
      %p111 = por %p109, %p110
      %p112 = scmp.ne.s32.totalorder %s103, %s104
      %p113 = scmp.eq.s32.totalorder %s30, 0
      %p114 = por %p112, %p113
      %p115 = scmp.ne.s32.totalorder %s103, %s104
      %p116 = scmp.eq.s32.totalorder %s31, 1
      %p117 = por %p115, %p116
      %p119 = scmp.ne.s32.totalorder %s104, %s118
      %p120 = scmp.eq.s32.totalorder %s31, 0
      %p121 = por %p119, %p120
      %s123 = sadd.s32 %s122, 1
      %p126 = scmp.eq.s32.totalorder %s25, 1
      %p127 = scmp.ne.s32.totalorder %s122, %s124
      %p128 = scmp.eq.s32.totalorder %s25, 0
      %p129 = por %p127, %p128
      %p130 = scmp.ne.s32.totalorder %s122, %s124
      %p131 = scmp.eq.s32.totalorder %s30, 1
      %p132 = por %p130, %p131
      %p133 = scmp.ne.s32.totalorder %s124, %s125
      %p134 = scmp.eq.s32.totalorder %s30, 0
      %p135 = por %p133, %p134
      %p136 = scmp.ne.s32.totalorder %s124, %s125
      %p137 = scmp.eq.s32.totalorder %s31, 1
      %p138 = por %p136, %p137
      %p140 = scmp.ne.s32.totalorder %s125, %s139
      %p141 = scmp.eq.s32.totalorder %s31, 0
      %p142 = por %p140, %p141
      %s144 = sadd.s32 %s143, 1
      %p147 = scmp.eq.s32.totalorder %s25, 1
      %p148 = scmp.ne.s32.totalorder %s143, %s145
      %p149 = scmp.eq.s32.totalorder %s25, 0
      %p150 = por %p148, %p149
      %p151 = scmp.ne.s32.totalorder %s143, %s145
      %p152 = scmp.eq.s32.totalorder %s30, 1
      %p153 = por %p151, %p152
      %p154 = scmp.ne.s32.totalorder %s145, %s146
      %p155 = scmp.eq.s32.totalorder %s30, 0
      %p156 = por %p154, %p155
      %p157 = scmp.ne.s32.totalorder %s145, %s146
      %p158 = scmp.eq.s32.totalorder %s31, 1
      %p159 = por %p157, %p158
      %p161 = scmp.ne.s32.totalorder %s146, %s160
      %p162 = scmp.eq.s32.totalorder %s31, 0
      %p163 = por %p161, %p162
      %s165 = sadd.s32 %s164, 1
      %p168 = scmp.eq.s32.totalorder %s25, 1
      %p169 = scmp.ne.s32.totalorder %s164, %s166
      %p170 = scmp.eq.s32.totalorder %s25, 0
      %p171 = por %p169, %p170
      %p172 = scmp.ne.s32.totalorder %s164, %s166
      %p173 = scmp.eq.s32.totalorder %s30, 1
      %p174 = por %p172, %p173
      %p175 = scmp.ne.s32.totalorder %s166, %s167
      %p176 = scmp.eq.s32.totalorder %s30, 0
      %p177 = por %p175, %p176
      %p178 = scmp.ne.s32.totalorder %s166, %s167
      %p179 = scmp.eq.s32.totalorder %s31, 1
      %p180 = por %p178, %p179
      %p182 = scmp.ne.s32.totalorder %s167, %s181
      %p183 = scmp.eq.s32.totalorder %s31, 0
      %p184 = por %p182, %p183
      %s186 = sadd.s32 %s185, 1
      %p189 = scmp.eq.s32.totalorder %s25, 1
      %p190 = scmp.ne.s32.totalorder %s185, %s187
      %p191 = scmp.eq.s32.totalorder %s25, 0
      %p192 = por %p190, %p191
      %p193 = scmp.ne.s32.totalorder %s185, %s187
      %p194 = scmp.eq.s32.totalorder %s30, 1
      %p195 = por %p193, %p194
      %p196 = scmp.ne.s32.totalorder %s187, %s188
      %p197 = scmp.eq.s32.totalorder %s30, 0
      %p198 = por %p196, %p197
      %p199 = scmp.ne.s32.totalorder %s187, %s188
      %p200 = scmp.eq.s32.totalorder %s31, 1
      %p201 = por %p199, %p200
      %p203 = scmp.ne.s32.totalorder %s188, %s202
      %p204 = scmp.eq.s32.totalorder %s31, 0
      %p205 = por %p203, %p204
      %s207 = sadd.s32 %s206, 1
      %p210 = scmp.eq.s32.totalorder %s25, 1
      %p211 = scmp.ne.s32.totalorder %s206, %s208
      %p212 = scmp.eq.s32.totalorder %s25, 0
      %p213 = por %p211, %p212
      %p214 = scmp.ne.s32.totalorder %s206, %s208
      %p215 = scmp.eq.s32.totalorder %s30, 1
      %p216 = por %p214, %p215
      %p217 = scmp.ne.s32.totalorder %s208, %s209
      %p218 = scmp.eq.s32.totalorder %s30, 0
      %p219 = por %p217, %p218
      %p220 = scmp.ne.s32.totalorder %s208, %s209
      %p221 = scmp.eq.s32.totalorder %s31, 1
      %p222 = por %p220, %p221
      %p224 = scmp.ne.s32.totalorder %s209, %s223
      %p225 = scmp.eq.s32.totalorder %s31, 0
      %p226 = por %p224, %p225
      %s228 = sadd.s32 %s227, 1
      %p231 = scmp.eq.s32.totalorder %s25, 1
      %p232 = scmp.ne.s32.totalorder %s227, %s229
      %p233 = scmp.eq.s32.totalorder %s25, 0
      %p234 = por %p232, %p233
      %p235 = scmp.ne.s32.totalorder %s227, %s229
      %p236 = scmp.eq.s32.totalorder %s30, 1
      %p237 = por %p235, %p236
      %p238 = scmp.ne.s32.totalorder %s229, %s230
      %p239 = scmp.eq.s32.totalorder %s30, 0
      %p240 = por %p238, %p239
      %p241 = scmp.ne.s32.totalorder %s229, %s230
      %p242 = scmp.eq.s32.totalorder %s31, 1
      %p243 = por %p241, %p242
      %p245 = scmp.ne.s32.totalorder %s230, %s244
      %p246 = scmp.eq.s32.totalorder %s31, 0
      %p247 = por %p245, %p246
      %s249 = sadd.s32 %s248, 1
      %p252 = scmp.eq.s32.totalorder %s25, 1
      %p253 = scmp.ne.s32.totalorder %s248, %s250
      %p254 = scmp.eq.s32.totalorder %s25, 0
      %p255 = por %p253, %p254
      %p256 = scmp.ne.s32.totalorder %s248, %s250
      %p257 = scmp.eq.s32.totalorder %s30, 1
      %p258 = por %p256, %p257
      %p259 = scmp.ne.s32.totalorder %s250, %s251
      %p260 = scmp.eq.s32.totalorder %s30, 0
      %p261 = por %p259, %p260
      %p262 = scmp.ne.s32.totalorder %s250, %s251
      %p263 = scmp.eq.s32.totalorder %s31, 1
      %p264 = por %p262, %p263
      %p266 = scmp.ne.s32.totalorder %s251, %s265
      %p267 = scmp.eq.s32.totalorder %s31, 0
      %p268 = por %p266, %p267
      %s269 = ssub.s32 %s25, %s32
      %p270 = scmp.eq.s32.totalorder %s269, 0
      %s272 = sadd.s32 %s271, 1
      %s273 = scalar_select %p270, %s271, %s272
      %p276 = pneg %p270
      %p277 = scmp.eq.s32.totalorder %s25, 1
      %p278 = por %p276, %p277
      %p279 = scmp.ne.s32.totalorder %s271, %s274
      %p280 = scmp.eq.s32.totalorder %s25, 0
      %p281 = por %p279, %p280
      %p282 = scmp.ne.s32.totalorder %s271, %s274
      %p283 = scmp.eq.s32.totalorder %s30, 1
      %p284 = por %p282, %p283
      %p285 = scmp.ne.s32.totalorder %s274, %s275
      %p286 = scmp.eq.s32.totalorder %s30, 0
      %p287 = por %p285, %p286
      %p288 = scmp.ne.s32.totalorder %s274, %s275
      %p289 = scmp.eq.s32.totalorder %s31, 1
      %p290 = por %p288, %p289
      %p292 = scmp.ne.s32.totalorder %s275, %s291
      %p293 = scmp.eq.s32.totalorder %s31, 0
      %p294 = por %p292, %p293
      %p295 = scmp.le.s32.totalorder 1, %s25
      %p296 = scmp.lt.s32.totalorder %s25, 3
      %p297 = pnand %p295, %p296
      %p298 = pneg %p297
      // Predicated region
      $region9: #{lenet5_forward.1} parent=5 // pred_check
        _
      $region10: #{lenet5_forward.1} parent=5 // pred_check_branch
        %300 = sbr.rel (%p297) target = $region12
      $region11: #{lenet5_forward.1} parent=5 // pred_region
        %s301 = ssub.s32 %s25, 1
        // Predicated region
        $region13: #{lenet5_forward.1} parent=11 // pred_check
          %p302 = pneg %p72
        $region14: #{lenet5_forward.1} parent=11 // pred_check_branch
          %304 = sbr.rel (%p302) target = $region16
        $region15: #{lenet5_forward.1} parent=11 // pred_region
          %s306 = ssub.s32 2560, 2560
          %307 = vsyncadd [#allocation6], %s306
          %s308 = sshll.u32 [#allocation5], 4
          %s309 = int_to_ptr.vmem [resolvable:$true] %s308
          %314 = dma.hbm_to_vmem [thread:$0]  %s1, 2560, %s309, [#allocation6], 128, 128, 8
        $region16: #{lenet5_forward.1} parent=11 // pred_fallthru
          _
        // Predicated region
        $region17: #{lenet5_forward.1} parent=11 // pred_check
          %p315 = pneg %p93
        $region18: #{lenet5_forward.1} parent=11 // pred_check_branch
          %317 = sbr.rel (%p315) target = $region20
        $region19: #{lenet5_forward.1} parent=11 // pred_region
          _
        $region20: #{lenet5_forward.1} parent=11 // pred_fallthru
          _
        // Predicated region
        $region21: #{lenet5_forward.1} parent=11 // pred_check
          %p318 = pneg %p114
        $region22: #{lenet5_forward.1} parent=11 // pred_check_branch
          %320 = sbr.rel (%p318) target = $region24
        $region23: #{lenet5_forward.1} parent=11 // pred_region
          %s322 = ssub.s32 10240, 10240
          %323 = vsyncadd [#allocation9], %s322
          %s324 = sshll.u32 [#allocation8], 4
          %s325 = int_to_ptr.vmem [resolvable:$true] %s324
          %330 = dma.hbm_to_vmem [thread:$0]  %s3, 10240, %s325, [#allocation9], 128, 128, 8
        $region24: #{lenet5_forward.1} parent=11 // pred_fallthru
          _
        // Predicated region
        $region25: #{lenet5_forward.1} parent=11 // pred_check
          %p331 = pneg %p135
        $region26: #{lenet5_forward.1} parent=11 // pred_check_branch
          %333 = sbr.rel (%p331) target = $region28
        $region27: #{lenet5_forward.1} parent=11 // pred_region
          %s335 = ssub.s32 32, 32
          %336 = vsyncadd [#allocation9], %s335
          %s338 = sshll.u32 [#allocation10], 4
          %s339 = int_to_ptr.vmem [resolvable:$true] %s338
          %341 = dma.hbm_to_vmem [thread:$0]  %s4, 32, %s339, [#allocation9]
        $region28: #{lenet5_forward.1} parent=11 // pred_fallthru
          _
        // Predicated region
        $region29: #{lenet5_forward.1} parent=11 // pred_check
          %p342 = pneg %p156
        $region30: #{lenet5_forward.1} parent=11 // pred_check_branch
          %344 = sbr.rel (%p342) target = $region32
        $region31: #{lenet5_forward.1} parent=11 // pred_region
          _
        $region32: #{lenet5_forward.1} parent=11 // pred_fallthru
          _
        // Predicated region
        $region33: #{lenet5_forward.1} parent=11 // pred_check
          %p345 = pneg %p177
        $region34: #{lenet5_forward.1} parent=11 // pred_check_branch
          %347 = sbr.rel (%p345) target = $region36
        $region35: #{lenet5_forward.1} parent=11 // pred_region
          %s349 = ssub.s32 16, 16
          %350 = vsyncadd [#allocation12], %s349
          %s352 = sshll.u32 [#allocation11], 4
          %s353 = int_to_ptr.vmem [resolvable:$true] %s352
          %355 = dma.hbm_to_vmem [thread:$0]  %s6, 16, %s353, [#allocation12]
        $region36: #{lenet5_forward.1} parent=11 // pred_fallthru
          _
        // Predicated region
        $region37: #{lenet5_forward.1} parent=11 // pred_check
          %p356 = pneg %p198
        $region38: #{lenet5_forward.1} parent=11 // pred_check_branch
          %358 = sbr.rel (%p356) target = $region40
        $region39: #{lenet5_forward.1} parent=11 // pred_region
          %s360 = ssub.s32 1024, 1024
          %361 = vsyncadd [#allocation12], %s360
          %s362 = sshll.u32 [#allocation13], 4
          %s363 = int_to_ptr.vmem [resolvable:$true] %s362
          %368 = dma.hbm_to_vmem [thread:$0]  %s7, 1024, %s363, [#allocation12], 64, 64, 4
        $region40: #{lenet5_forward.1} parent=11 // pred_fallthru
          _
        // Predicated region
        $region41: #{lenet5_forward.1} parent=11 // pred_check
          %p369 = pneg %p219
        $region42: #{lenet5_forward.1} parent=11 // pred_check_branch
          %371 = sbr.rel (%p369) target = $region44
        $region43: #{lenet5_forward.1} parent=11 // pred_region
          %s373 = ssub.s32 16, 16
          %374 = vsyncadd [#allocation15], %s373
          %s376 = sshll.u32 [#allocation14], 4
          %s377 = int_to_ptr.vmem [resolvable:$true] %s376
          %379 = dma.hbm_to_vmem [thread:$0]  %s8, 16, %s377, [#allocation15]
        $region44: #{lenet5_forward.1} parent=11 // pred_fallthru
          _
        // Predicated region
        $region45: #{lenet5_forward.1} parent=11 // pred_check
          %p380 = pneg %p240
        $region46: #{lenet5_forward.1} parent=11 // pred_check_branch
          %382 = sbr.rel (%p380) target = $region48
        $region47: #{lenet5_forward.1} parent=11 // pred_region
          %s384 = ssub.s32 1024, 1024
          %385 = vsyncadd [#allocation15], %s384
          %s386 = sshll.u32 [#allocation16], 4
          %s387 = int_to_ptr.vmem [resolvable:$true] %s386
          %392 = dma.hbm_to_vmem [thread:$0]  %s9, 1024, %s387, [#allocation15], 64, 64, 4
        $region48: #{lenet5_forward.1} parent=11 // pred_fallthru
          _
        // Predicated region
        $region49: #{lenet5_forward.1} parent=11 // pred_check
          %p393 = pneg %p261
        $region50: #{lenet5_forward.1} parent=11 // pred_check_branch
          %395 = sbr.rel (%p393) target = $region52
        $region51: #{lenet5_forward.1} parent=11 // pred_region
          %s397 = ssub.s32 16, 16
          %398 = vsyncadd [#allocation18], %s397
          %s400 = sshll.u32 [#allocation17], 4
          %s401 = int_to_ptr.vmem [resolvable:$true] %s400
          %403 = dma.hbm_to_vmem [thread:$0]  %s10, 16, %s401, [#allocation18]
        $region52: #{lenet5_forward.1} parent=11 // pred_fallthru
          _
      $region12: #{lenet5_forward.1} parent=5 // pred_fallthru
        _
      %p404 = scmp.lt.s32.totalorder %s25, 2
      // Predicated region
      $region53: #{lenet5_forward.1} parent=5 // pred_check
        %p405 = pneg %p404
      $region54: #{lenet5_forward.1} parent=5 // pred_check_branch
        %407 = sbr.rel (%p405) target = $region56
      $region55: #{lenet5_forward.1} parent=5 // pred_region
        // Predicated region
        $region57: #{lenet5_forward.1} parent=55 // pred_check
          %p408 = pneg %p45
        $region58: #{lenet5_forward.1} parent=55 // pred_check_branch
          %410 = sbr.rel (%p408) target = $region60
        $region59: #{lenet5_forward.1} parent=55 // pred_region
          %p411 = scmp.lt.s32.totalorder %s25, 1
          %s412 = scalar_select %p411, %s25, 1
          %s413 = smul.addr %s412, 4
          %s414 = smul.addr %s413, 8
          %s415 = scalar_lea.vmem %s0, %s414
        $region60: #{lenet5_forward.1} parent=55 // pred_fallthru
          _
      $region56: #{lenet5_forward.1} parent=5 // pred_fallthru
        _
      %p416 = scmp.le.s32.totalorder 1, %s25
      %p417 = scmp.lt.s32.totalorder %s25, 3
      %p418 = pnand %p416, %p417
      %p419 = pneg %p418
      // Predicated region
      $region61: #{lenet5_forward.1} parent=5 // pred_check
        _
      $region62: #{lenet5_forward.1} parent=5 // pred_check_branch
        %421 = sbr.rel (%p418) target = $region64
      $region63: #{lenet5_forward.1} parent=5 // pred_region
        %s422 = ssub.s32 %s25, 1
        // Predicated region
        $region65: #{lenet5_forward.1} parent=63 // pred_check
          %p423 = pneg %p72
        $region66: #{lenet5_forward.1} parent=63 // pred_check_branch
          %425 = sbr.rel (%p423) target = $region68
        $region67: #{lenet5_forward.1} parent=63 // pred_region
          %426 = dma.done [#allocation6], 2560
        $region68: #{lenet5_forward.1} parent=63 // pred_fallthru
          _
        // Predicated region
        $region69: #{lenet5_forward.1} parent=63 // pred_check
          %p427 = pneg %p114
        $region70: #{lenet5_forward.1} parent=63 // pred_check_branch
          %429 = sbr.rel (%p427) target = $region72
        $region71: #{lenet5_forward.1} parent=63 // pred_region
          %430 = dma.done [#allocation9], 10240
        $region72: #{lenet5_forward.1} parent=63 // pred_fallthru
          _
        // Predicated region
        $region73: #{lenet5_forward.1} parent=63 // pred_check
          %p431 = pneg %p135
        $region74: #{lenet5_forward.1} parent=63 // pred_check_branch
          %433 = sbr.rel (%p431) target = $region76
        $region75: #{lenet5_forward.1} parent=63 // pred_region
          %434 = dma.done [#allocation9], 32
        $region76: #{lenet5_forward.1} parent=63 // pred_fallthru
          _
        // Predicated region
        $region77: #{lenet5_forward.1} parent=63 // pred_check
          %p435 = pneg %p177
        $region78: #{lenet5_forward.1} parent=63 // pred_check_branch
          %437 = sbr.rel (%p435) target = $region80
        $region79: #{lenet5_forward.1} parent=63 // pred_region
          %438 = dma.done [#allocation12], 16
        $region80: #{lenet5_forward.1} parent=63 // pred_fallthru
          _
        // Predicated region
        $region81: #{lenet5_forward.1} parent=63 // pred_check
          %p439 = pneg %p198
        $region82: #{lenet5_forward.1} parent=63 // pred_check_branch
          %441 = sbr.rel (%p439) target = $region84
        $region83: #{lenet5_forward.1} parent=63 // pred_region
          %442 = dma.done [#allocation12], 1024
        $region84: #{lenet5_forward.1} parent=63 // pred_fallthru
          _
        // Predicated region
        $region85: #{lenet5_forward.1} parent=63 // pred_check
          %p443 = pneg %p219
        $region86: #{lenet5_forward.1} parent=63 // pred_check_branch
          %445 = sbr.rel (%p443) target = $region88
        $region87: #{lenet5_forward.1} parent=63 // pred_region
          %446 = dma.done [#allocation15], 16
        $region88: #{lenet5_forward.1} parent=63 // pred_fallthru
          _
        // Predicated region
        $region89: #{lenet5_forward.1} parent=63 // pred_check
          %p447 = pneg %p240
        $region90: #{lenet5_forward.1} parent=63 // pred_check_branch
          %449 = sbr.rel (%p447) target = $region92
        $region91: #{lenet5_forward.1} parent=63 // pred_region
          %450 = dma.done [#allocation15], 1024
        $region92: #{lenet5_forward.1} parent=63 // pred_fallthru
          _
        // Predicated region
        $region93: #{lenet5_forward.1} parent=63 // pred_check
          %p451 = pneg %p261
        $region94: #{lenet5_forward.1} parent=63 // pred_check_branch
          %453 = sbr.rel (%p451) target = $region96
        $region95: #{lenet5_forward.1} parent=63 // pred_region
          %454 = dma.done [#allocation18], 16
        $region96: #{lenet5_forward.1} parent=63 // pred_fallthru
          _
        %p455 = scmp.lt.s32.totalorder %s30, 1
        %s456 = scalar_select %p455, %s30, 1
        %s457 = smul.addr %s456, 4
        %s458 = smul.addr %s457, 8
        %s459 = scalar_lea.vmem %s0, %s458
        %p460 = pneg %p51
        %p461 = pneg %p48
        %p462 = pneg %p72
        %p463 = pneg %p69
        %p464 = pneg %p93
        %p465 = pneg %p90
        %p466 = pneg %p114
        %p467 = pneg %p111
        %p468 = pneg %p135
        %p469 = pneg %p132
        %p470 = pneg %p156
        %p471 = pneg %p153
        %p472 = pneg %p177
        %p473 = pneg %p174
        %p474 = pneg %p198
        %p475 = pneg %p195
        %p476 = pneg %p219
        %p477 = pneg %p216
        %p478 = pneg %p240
        %p479 = pneg %p237
        %p480 = pneg %p261
        %p481 = pneg %p258
        %p482 = pneg %p287
        %p483 = pneg %p284
        %s484 = sand.u32 %s274, 1
        %s485 = scalar_lea.sflag [#allocation7], %s484
        %s486 = sand.u32 %s274, 1
        %s487 = scalar_lea.vmem [#allocation19], %s486
        %p488 = scmp.lt.s32.totalorder %s30, 1
        %s489 = scalar_select %p488, %s30, 1
        %s490 = smul.addr %s489, 4
        %s491 = smul.addr %s490, 8
        %s492 = scalar_lea.vmem %s0, %s491
        %v494 = vld [vmem:[%s492] sm:$0xff]
        %v495 = vld [vmem:[%s492 + $0x8] sm:$0xff]
        %v496 = vld [vmem:[%s492 + $0x10] sm:$0xff]
        %v497 = vpack.c.bf16 %v495, %v494
        %v498 = vpack.c.bf16 %v496, %v496
        %v499 = vld [vmem:[#allocation5] sm:$0xff]
        %v500 = vld [vmem:[#allocation5 + $0x8] sm:$0xff]
        %v501 = vld [vmem:[#allocation5 + $0x10] sm:$0xff]
        %v502 = vld [vmem:[#allocation5 + $0x18] sm:$0x33]
        %v503 = vld [vmem:[%s492 + $0x1] sm:$0xff]
        %v504 = vld [vmem:[%s492 + $0x9] sm:$0xff]
        %v505 = vld [vmem:[%s492 + $0x11] sm:$0xff]
        %v506 = vpack.c.bf16 %v504, %v503
        %v507 = vpack.c.bf16 %v505, %v505
        %s508 = scalar_lea.vmem [#allocation5], 32
        %v509 = vld [vmem:[%s508] sm:$0xff]
        %v510 = vld [vmem:[%s508 + $0x8] sm:$0xff]
        %v511 = vld [vmem:[%s508 + $0x10] sm:$0xff]
        %v512 = vld [vmem:[%s508 + $0x18] sm:$0x33]
        %v517 = vunpack.c.l.b16 %v509
        %v518 = vunpack.c.h.b16 %v509
        %v519 = vunpack.c.l.b16 %v510
        %v520 = vunpack.c.h.b16 %v510
        %v521 = vunpack.c.l.b16 %v511
        %v522 = vunpack.c.h.b16 %v511
        %v523 = vunpack.c.l.b16 %v512
        %v524 = vunpack.c.h.b16 %v512
        %v525 = vpack.c.b16 %v519, %v517
        %v526 = vpack.c.b16 %v520, %v518
        %v527 = vpack.c.b16 %v523, %v521
        %v528 = vpack.c.b16 %v524, %v522
        %vm531 = vcmask 228352
        %v533 = vsel %vm531, %v506, 0
        %v536 = vsel %vm531, %v507, 0
        %vm538 = vcmask 1045504
        %v540 = vsel %vm538, %v527, 0
        %v543 = vsel %vm538, %v528, 0
        %545 = vmatprep.subr.bf16.mxu0 %v526
        %546 = vmatpush1.bf16.msra.mxu0 %v525
        %547 = vmatprep.subr.bf16.mxu0 %v543
        %548 = vmatpush1.bf16.msra.mxu0 %v540
        %549 = vmatprep.subr.bf16.mxu0 0
        %550 = vmatpush1.bf16.msra.mxu0 0
        %551 = vmatprep.subr.bf16.mxu0 0
        %552 = vmatpush1.bf16.msra.mxu0 0
        %553 = vmatprep.subr.bf16.mxu0 0
        %554 = vmatpush1.bf16.msra.mxu0 0
        %555 = vmatprep.subr.bf16.mxu0 0
        %556 = vmatpush1.bf16.msra.mxu0 0
        %557 = vmatprep.subr.bf16.mxu0 0
        %558 = vmatpush1.bf16.msra.mxu0 0
        %559 = vmatprep.subr.bf16.mxu0 0
        %560 = vmatpush1.bf16.msra.mxu0 0
        %561 = vmatprep.subr.bf16.mxu0 0
        %562 = vmatpush1.bf16.msra.mxu0 0
        %563 = vmatprep.subr.bf16.mxu0 0
        %564 = vmatpush1.bf16.msra.mxu0 0
        %565 = vmatprep.subr.bf16.mxu0 0
        %566 = vmatpush1.bf16.msra.mxu0 0
        %567 = vmatprep.subr.bf16.mxu0 0
        %568 = vmatpush1.bf16.msra.mxu0 0
        %569 = vmatprep.subr.bf16.mxu0 0
        %570 = vmatpush1.bf16.msra.mxu0 0
        %571 = vmatprep.subr.bf16.mxu0 0
        %572 = vmatpush1.bf16.msra.mxu0 0
        %573 = vmatprep.subr.bf16.mxu0 0
        %574 = vmatpush1.bf16.msra.mxu0 0
        %575 = vmatprep.subr.bf16.mxu0 0
        %576 = vmatpush1.bf16.msra.mxu0 0
        %577 = vmatprep.mubr.bf16.mxu0 0
        %578 = vmatmul.mubr.bf16.gmra.mrb[0].mxu0 %v533
        %v579 = vpop.f32.mrb[0].mxu0
        %v580 = vadd.f32 0.0, %v579
        %v581 = vpop.f32.mrb[0].mxu0
        %v582 = vadd.f32 0.0, %v581
        %v583 = vpop.f32.mrb[0].mxu0
        %v584 = vadd.f32 0.0, %v583
        %v585 = vpop.f32.mrb[0].mxu0
        %v586 = vadd.f32 0.0, %v585
        %587 = vmatprep.mubr.bf16.mxu0 0
        %588 = vmatmul.mubr.bf16.gmra.mrb[0].mxu0 %v536
        %v589 = vpop.f32.mrb[0].mxu0
        %v590 = vadd.f32 0.0, %v589
        %v591 = vpop.f32.mrb[0].mxu0
        %v592 = vadd.f32 0.0, %v591
        %v593 = vpop.f32.mrb[0].mxu0
        %v594 = vpop.f32.mrb[0].mxu0
        %595 = vdwg.mxu0
        %v600 = vunpack.c.l.b16 %v499
        %v601 = vunpack.c.h.b16 %v499
        %v602 = vunpack.c.l.b16 %v500
        %v603 = vunpack.c.h.b16 %v500
        %v604 = vunpack.c.l.b16 %v501
        %v605 = vunpack.c.h.b16 %v501
        %v606 = vunpack.c.l.b16 %v502
        %v607 = vunpack.c.h.b16 %v502
        %v608 = vpack.c.b16 %v602, %v600
        %v609 = vpack.c.b16 %v603, %v601
        %v610 = vpack.c.b16 %v606, %v604
        %v611 = vpack.c.b16 %v607, %v605
        %v615 = vsel %vm531, %v497, 0
        %v618 = vsel %vm531, %v498, 0
        %v621 = vsel %vm538, %v610, 0
        %v624 = vsel %vm538, %v611, 0
        %626 = vmatprep.subr.bf16.mxu0 %v609
        %627 = vmatpush1.bf16.msra.mxu0 %v608
        %628 = vmatprep.subr.bf16.mxu0 %v624
        %629 = vmatpush1.bf16.msra.mxu0 %v621
        %630 = vmatprep.subr.bf16.mxu0 0
        %631 = vmatpush1.bf16.msra.mxu0 0
        %632 = vmatprep.subr.bf16.mxu0 0
        %633 = vmatpush1.bf16.msra.mxu0 0
        %634 = vmatprep.subr.bf16.mxu0 0
        %635 = vmatpush1.bf16.msra.mxu0 0
        %636 = vmatprep.subr.bf16.mxu0 0
        %637 = vmatpush1.bf16.msra.mxu0 0
        %638 = vmatprep.subr.bf16.mxu0 0
        %639 = vmatpush1.bf16.msra.mxu0 0
        %640 = vmatprep.subr.bf16.mxu0 0
        %641 = vmatpush1.bf16.msra.mxu0 0
        %642 = vmatprep.subr.bf16.mxu0 0
        %643 = vmatpush1.bf16.msra.mxu0 0
        %644 = vmatprep.subr.bf16.mxu0 0
        %645 = vmatpush1.bf16.msra.mxu0 0
        %646 = vmatprep.subr.bf16.mxu0 0
        %647 = vmatpush1.bf16.msra.mxu0 0
        %648 = vmatprep.subr.bf16.mxu0 0
        %649 = vmatpush1.bf16.msra.mxu0 0
        %650 = vmatprep.subr.bf16.mxu0 0
        %651 = vmatpush1.bf16.msra.mxu0 0
        %652 = vmatprep.subr.bf16.mxu0 0
        %653 = vmatpush1.bf16.msra.mxu0 0
        %654 = vmatprep.subr.bf16.mxu0 0
        %655 = vmatpush1.bf16.msra.mxu0 0
        %656 = vmatprep.subr.bf16.mxu0 0
        %657 = vmatpush1.bf16.msra.mxu0 0
        %658 = vmatprep.mubr.bf16.mxu0 0
        %659 = vmatmul.mubr.bf16.gmra.mrb[0].mxu0 %v615
        %v660 = vpop.f32.mrb[0].mxu0
        %v661 = vadd.f32 %v580, %v660
        %v662 = vpop.f32.mrb[0].mxu0
        %v663 = vadd.f32 %v582, %v662
        %v664 = vpop.f32.mrb[0].mxu0
        %v665 = vadd.f32 %v584, %v664
        %v666 = vpop.f32.mrb[0].mxu0
        %v667 = vadd.f32 %v586, %v666
        %668 = vmatprep.mubr.bf16.mxu0 0
        %669 = vmatmul.mubr.bf16.gmra.mrb[0].mxu0 %v618
        %v670 = vpop.f32.mrb[0].mxu0
        %v671 = vadd.f32 %v590, %v670
        %v672 = vpop.f32.mrb[0].mxu0
        %v673 = vadd.f32 %v592, %v672
        %v674 = vpop.f32.mrb[0].mxu0
        %v675 = vpop.f32.mrb[0].mxu0
        %676 = vdwg.mxu0
        %v677 = vld [vmem:[%s492 + $0x2] sm:$0xff]
        %v678 = vld [vmem:[%s492 + $0xa] sm:$0xff]
        %v679 = vld [vmem:[%s492 + $0x12] sm:$0xff]
        %v680 = vpack.c.bf16 %v678, %v677
        %v681 = vpack.c.bf16 %v679, %v679
        %s682 = scalar_lea.vmem [#allocation5], 64
        %v683 = vld [vmem:[%s682] sm:$0xff]
        %v684 = vld [vmem:[%s682 + $0x8] sm:$0xff]
        %v685 = vld [vmem:[%s682 + $0x10] sm:$0xff]
        %v686 = vld [vmem:[%s682 + $0x18] sm:$0x33]
        %v691 = vunpack.c.l.b16 %v683
        %v692 = vunpack.c.h.b16 %v683
        %v693 = vunpack.c.l.b16 %v684
        %v694 = vunpack.c.h.b16 %v684
        %v695 = vunpack.c.l.b16 %v685
        %v696 = vunpack.c.h.b16 %v685
        %v697 = vunpack.c.l.b16 %v686
        %v698 = vunpack.c.h.b16 %v686
        %v699 = vpack.c.b16 %v693, %v691
        %v700 = vpack.c.b16 %v694, %v692
        %v701 = vpack.c.b16 %v697, %v695
        %v702 = vpack.c.b16 %v698, %v696
        %v706 = vsel %vm531, %v680, 0
        %v709 = vsel %vm531, %v681, 0
        %v712 = vsel %vm538, %v701, 0
        %v715 = vsel %vm538, %v702, 0
        %717 = vmatprep.subr.bf16.mxu0 %v700
        %718 = vmatpush1.bf16.msra.mxu0 %v699
        %719 = vmatprep.subr.bf16.mxu0 %v715
        %720 = vmatpush1.bf16.msra.mxu0 %v712
        %721 = vmatprep.subr.bf16.mxu0 0
        %722 = vmatpush1.bf16.msra.mxu0 0
        %723 = vmatprep.subr.bf16.mxu0 0
        %724 = vmatpush1.bf16.msra.mxu0 0
        %725 = vmatprep.subr.bf16.mxu0 0
        %726 = vmatpush1.bf16.msra.mxu0 0
        %727 = vmatprep.subr.bf16.mxu0 0
        %728 = vmatpush1.bf16.msra.mxu0 0
        %729 = vmatprep.subr.bf16.mxu0 0
        %730 = vmatpush1.bf16.msra.mxu0 0
        %731 = vmatprep.subr.bf16.mxu0 0
        %732 = vmatpush1.bf16.msra.mxu0 0
        %733 = vmatprep.subr.bf16.mxu0 0
        %734 = vmatpush1.bf16.msra.mxu0 0
        %735 = vmatprep.subr.bf16.mxu0 0
        %736 = vmatpush1.bf16.msra.mxu0 0
        %737 = vmatprep.subr.bf16.mxu0 0
        %738 = vmatpush1.bf16.msra.mxu0 0
        %739 = vmatprep.subr.bf16.mxu0 0
        %740 = vmatpush1.bf16.msra.mxu0 0
        %741 = vmatprep.subr.bf16.mxu0 0
        %742 = vmatpush1.bf16.msra.mxu0 0
        %743 = vmatprep.subr.bf16.mxu0 0
        %744 = vmatpush1.bf16.msra.mxu0 0
        %745 = vmatprep.subr.bf16.mxu0 0
        %746 = vmatpush1.bf16.msra.mxu0 0
        %747 = vmatprep.subr.bf16.mxu0 0
        %748 = vmatpush1.bf16.msra.mxu0 0
        %749 = vmatprep.mubr.bf16.mxu0 0
        %750 = vmatmul.mubr.bf16.gmra.mrb[0].mxu0 %v706
        %v751 = vpop.f32.mrb[0].mxu0
        %v752 = vadd.f32 0.0, %v751
        %v753 = vpop.f32.mrb[0].mxu0
        %v754 = vadd.f32 0.0, %v753
        %v755 = vpop.f32.mrb[0].mxu0
        %v756 = vadd.f32 0.0, %v755
        %v757 = vpop.f32.mrb[0].mxu0
        %v758 = vadd.f32 0.0, %v757
        %759 = vmatprep.mubr.bf16.mxu0 0
        %760 = vmatmul.mubr.bf16.gmra.mrb[0].mxu0 %v709
        %v761 = vpop.f32.mrb[0].mxu0
        %v762 = vadd.f32 0.0, %v761
        %v763 = vpop.f32.mrb[0].mxu0
        %v764 = vadd.f32 0.0, %v763
        %v765 = vpop.f32.mrb[0].mxu0
        %v766 = vpop.f32.mrb[0].mxu0
        %767 = vdwg.mxu0
        %v768 = vadd.f32 %v661, %v752
        %v769 = vadd.f32 %v663, %v754
        %v770 = vadd.f32 %v665, %v756
        %v771 = vadd.f32 %v667, %v758
        %v772 = vadd.f32 %v671, %v762
        %v773 = vadd.f32 %v673, %v764
        %v774 = vld [vmem:[%s492 + $0x3] sm:$0xff]
        %v775 = vld [vmem:[%s492 + $0xb] sm:$0xff]
        %v776 = vld [vmem:[%s492 + $0x13] sm:$0xff]
        %v777 = vpack.c.bf16 %v775, %v774
        %v778 = vpack.c.bf16 %v776, %v776
        %s779 = scalar_lea.vmem [#allocation5], 96
        %v780 = vld [vmem:[%s779] sm:$0xff]
        %v781 = vld [vmem:[%s779 + $0x8] sm:$0xff]
        %v782 = vld [vmem:[%s779 + $0x10] sm:$0xff]
        %v783 = vld [vmem:[%s779 + $0x18] sm:$0x33]
        %v788 = vunpack.c.l.b16 %v780
        %v789 = vunpack.c.h.b16 %v780
        %v790 = vunpack.c.l.b16 %v781
        %v791 = vunpack.c.h.b16 %v781
        %v792 = vunpack.c.l.b16 %v782
        %v793 = vunpack.c.h.b16 %v782
        %v794 = vunpack.c.l.b16 %v783
        %v795 = vunpack.c.h.b16 %v783
        %v796 = vpack.c.b16 %v790, %v788
        %v797 = vpack.c.b16 %v791, %v789
        %v798 = vpack.c.b16 %v794, %v792
        %v799 = vpack.c.b16 %v795, %v793
        %v803 = vsel %vm531, %v777, 0
        %v806 = vsel %vm531, %v778, 0
        %v809 = vsel %vm538, %v798, 0
        %v812 = vsel %vm538, %v799, 0
        %814 = vmatprep.subr.bf16.mxu0 %v797
        %815 = vmatpush1.bf16.msra.mxu0 %v796
        %816 = vmatprep.subr.bf16.mxu0 %v812
        %817 = vmatpush1.bf16.msra.mxu0 %v809
        %818 = vmatprep.subr.bf16.mxu0 0
        %819 = vmatpush1.bf16.msra.mxu0 0
        %820 = vmatprep.subr.bf16.mxu0 0
        %821 = vmatpush1.bf16.msra.mxu0 0
        %822 = vmatprep.subr.bf16.mxu0 0
        %823 = vmatpush1.bf16.msra.mxu0 0
        %824 = vmatprep.subr.bf16.mxu0 0
        %825 = vmatpush1.bf16.msra.mxu0 0
        %826 = vmatprep.subr.bf16.mxu0 0
        %827 = vmatpush1.bf16.msra.mxu0 0
        %828 = vmatprep.subr.bf16.mxu0 0
        %829 = vmatpush1.bf16.msra.mxu0 0
        %830 = vmatprep.subr.bf16.mxu0 0
        %831 = vmatpush1.bf16.msra.mxu0 0
        %832 = vmatprep.subr.bf16.mxu0 0
        %833 = vmatpush1.bf16.msra.mxu0 0
        %834 = vmatprep.subr.bf16.mxu0 0
        %835 = vmatpush1.bf16.msra.mxu0 0
        %836 = vmatprep.subr.bf16.mxu0 0
        %837 = vmatpush1.bf16.msra.mxu0 0
        %838 = vmatprep.subr.bf16.mxu0 0
        %839 = vmatpush1.bf16.msra.mxu0 0
        %840 = vmatprep.subr.bf16.mxu0 0
        %841 = vmatpush1.bf16.msra.mxu0 0
        %842 = vmatprep.subr.bf16.mxu0 0
        %843 = vmatpush1.bf16.msra.mxu0 0
        %844 = vmatprep.subr.bf16.mxu0 0
        %845 = vmatpush1.bf16.msra.mxu0 0
        %846 = vmatprep.mubr.bf16.mxu0 0
        %847 = vmatmul.mubr.bf16.gmra.mrb[0].mxu0 %v803
        %v848 = vpop.f32.mrb[0].mxu0
        %v849 = vadd.f32 0.0, %v848
        %v850 = vpop.f32.mrb[0].mxu0
        %v851 = vadd.f32 0.0, %v850
        %v852 = vpop.f32.mrb[0].mxu0
        %v853 = vadd.f32 0.0, %v852
        %v854 = vpop.f32.mrb[0].mxu0
        %v855 = vadd.f32 0.0, %v854
        %856 = vmatprep.mubr.bf16.mxu0 0
        %857 = vmatmul.mubr.bf16.gmra.mrb[0].mxu0 %v806
        %v858 = vpop.f32.mrb[0].mxu0
        %v859 = vadd.f32 0.0, %v858
        %v860 = vpop.f32.mrb[0].mxu0
        %v861 = vadd.f32 0.0, %v860
        %v862 = vpop.f32.mrb[0].mxu0
        %v863 = vpop.f32.mrb[0].mxu0
        %864 = vdwg.mxu0
        %v865 = vadd.f32 %v768, %v849
        %v866 = vadd.f32 %v769, %v851
        %v867 = vadd.f32 %v770, %v853
        %v868 = vadd.f32 %v771, %v855
        %v869 = vadd.f32 %v772, %v859
        %v870 = vadd.f32 %v773, %v861
        %v871 = vld [vmem:[%s492 + $0x4] sm:$0xff]
        %v872 = vld [vmem:[%s492 + $0xc] sm:$0xff]
        %v873 = vld [vmem:[%s492 + $0x14] sm:$0xff]
        %v874 = vpack.c.bf16 %v872, %v871
        %v875 = vpack.c.bf16 %v873, %v873
        %s876 = scalar_lea.vmem [#allocation5], 128
        %v877 = vld [vmem:[%s876] sm:$0xff]
        %v878 = vld [vmem:[%s876 + $0x8] sm:$0xff]
        %v879 = vld [vmem:[%s876 + $0x10] sm:$0xff]
        %v880 = vld [vmem:[%s876 + $0x18] sm:$0x33]
        %v885 = vunpack.c.l.b16 %v877
        %v886 = vunpack.c.h.b16 %v877
        %v887 = vunpack.c.l.b16 %v878
        %v888 = vunpack.c.h.b16 %v878
        %v889 = vunpack.c.l.b16 %v879
        %v890 = vunpack.c.h.b16 %v879
        %v891 = vunpack.c.l.b16 %v880
        %v892 = vunpack.c.h.b16 %v880
        %v893 = vpack.c.b16 %v887, %v885
        %v894 = vpack.c.b16 %v888, %v886
        %v895 = vpack.c.b16 %v891, %v889
        %v896 = vpack.c.b16 %v892, %v890
        %v900 = vsel %vm531, %v874, 0
        %v903 = vsel %vm531, %v875, 0
        %v906 = vsel %vm538, %v895, 0
        %v909 = vsel %vm538, %v896, 0
        %911 = vmatprep.subr.bf16.mxu0 %v894
        %912 = vmatpush1.bf16.msra.mxu0 %v893
        %913 = vmatprep.subr.bf16.mxu0 %v909
        %914 = vmatpush1.bf16.msra.mxu0 %v906
        %915 = vmatprep.subr.bf16.mxu0 0
        %916 = vmatpush1.bf16.msra.mxu0 0
        %917 = vmatprep.subr.bf16.mxu0 0
        %918 = vmatpush1.bf16.msra.mxu0 0
        %919 = vmatprep.subr.bf16.mxu0 0
        %920 = vmatpush1.bf16.msra.mxu0 0
        %921 = vmatprep.subr.bf16.mxu0 0
        %922 = vmatpush1.bf16.msra.mxu0 0
        %923 = vmatprep.subr.bf16.mxu0 0
        %924 = vmatpush1.bf16.msra.mxu0 0
        %925 = vmatprep.subr.bf16.mxu0 0
        %926 = vmatpush1.bf16.msra.mxu0 0
        %927 = vmatprep.subr.bf16.mxu0 0
        %928 = vmatpush1.bf16.msra.mxu0 0
        %929 = vmatprep.subr.bf16.mxu0 0
        %930 = vmatpush1.bf16.msra.mxu0 0
        %931 = vmatprep.subr.bf16.mxu0 0
        %932 = vmatpush1.bf16.msra.mxu0 0
        %933 = vmatprep.subr.bf16.mxu0 0
        %934 = vmatpush1.bf16.msra.mxu0 0
        %935 = vmatprep.subr.bf16.mxu0 0
        %936 = vmatpush1.bf16.msra.mxu0 0
        %937 = vmatprep.subr.bf16.mxu0 0
        %938 = vmatpush1.bf16.msra.mxu0 0
        %939 = vmatprep.subr.bf16.mxu0 0
        %940 = vmatpush1.bf16.msra.mxu0 0
        %941 = vmatprep.subr.bf16.mxu0 0
        %942 = vmatpush1.bf16.msra.mxu0 0
        %943 = vmatprep.mubr.bf16.mxu0 0
        %944 = vmatmul.mubr.bf16.gmra.mrb[0].mxu0 %v900
        %v945 = vpop.f32.mrb[0].mxu0
        %v946 = vadd.f32 0.0, %v945
        %v947 = vpop.f32.mrb[0].mxu0
        %v948 = vadd.f32 0.0, %v947
        %v949 = vpop.f32.mrb[0].mxu0
        %v950 = vadd.f32 0.0, %v949
        %v951 = vpop.f32.mrb[0].mxu0
        %v952 = vadd.f32 0.0, %v951
        %953 = vmatprep.mubr.bf16.mxu0 0
        %954 = vmatmul.mubr.bf16.gmra.mrb[0].mxu0 %v903
        %v955 = vpop.f32.mrb[0].mxu0
        %v956 = vadd.f32 0.0, %v955
        %v957 = vpop.f32.mrb[0].mxu0
        %v958 = vadd.f32 0.0, %v957
        %v959 = vpop.f32.mrb[0].mxu0
        %v960 = vpop.f32.mrb[0].mxu0
        %961 = vdwg.mxu0
        %v962 = vadd.f32 %v865, %v946
        %v963 = vadd.f32 %v866, %v948
        %v964 = vadd.f32 %v867, %v950
        %v965 = vadd.f32 %v868, %v952
        %v966 = vadd.f32 %v869, %v956
        %v967 = vadd.f32 %v870, %v958
        %v968 = vld [vmem:[%s2] sm:$0x3]
        %v970 = vlaneseq
        %v971 = vshrl.u32 %v970, 7
        %v972 = vsub.s32 0, %v971
        %v973 = vrot.slane %v968, %v972
        %v974 = vlaneseq
        %v975 = vshrl.u32 %v974, 7
        %v976 = vsub.s32 1, %v975
        %v977 = vrot.slane %v968, %v976
        %v980 = vadd.f32 %v962, %v973
        %v981 = vadd.f32 %v963, %v977
        %v982 = vadd.f32 %v964, %v973
        %v983 = vadd.f32 %v965, %v977
        %v984 = vadd.f32 %v966, %v973
        %v985 = vadd.f32 %v967, %v977
        %v986 = vmax.f32 %v980, 0.0
        %v987 = vmax.f32 %v981, 0.0
        %v988 = vmax.f32 %v982, 0.0
        %v989 = vmax.f32 %v983, 0.0
        %v990 = vmax.f32 %v984, 0.0
        %v991 = vmax.f32 %v985, 0.0
        %v992 = vmax.f32 %v986, %v987
        %v993 = vmax.f32 %v988, %v989
        %v994 = vmax.f32 %v990, %v991
        %995 = vst [vmem:[#allocation2] sm:$0xff] %v992
        %996 = vst [vmem:[#allocation2 + $0x8] sm:$0xff] %v993
        %997 = vst [vmem:[#allocation2 + $0x10] sm:$0xff] %v994
        %v998 = vld [vmem:[#allocation2] ss:$2 sm:$0xff]
        %s999 = scalar_lea.vmem [#allocation2], 16
        %v1000 = vld [vmem:[%s999] ss:$2 sm:$0xf]
        %s1001 = scalar_lea.vmem [#allocation2], 1
        %v1002 = vld [vmem:[%s1001] ss:$2 sm:$0xff]
        %s1003 = scalar_lea.vmem [#allocation2], 17
        %v1004 = vld [vmem:[%s1003] ss:$2 sm:$0xf]
        %v1005 = vmax.f32 %v998, %v1002
        %v1006 = vmax.f32 %v1000, %v1004
        %v1007 = vpack.c.bf16 %v1006, %v1005
        %v1009 = vunpack.c.l.b16 %v1007
        %v1010 = vunpack.c.h.b16 %v1007
        %v1011 = vpack.c.b16 %v1009, %v1009
        %v1012 = vpack.c.b16 %v1010, %v1010
        %1015 = vst [vmem:[#allocation3] sm:$0xf] %v1011
        %1016 = vst [vmem:[#allocation3 + $0x4] sm:$0x3] %v1012
        %v1017 = vld [vmem:[#allocation3] sm:$0xf]
        %v1018 = vld [vmem:[#allocation8] sm:$0xff]
        %v1019 = vld [vmem:[#allocation8 + $0x8] sm:$0xff]
        %v1020 = vld [vmem:[#allocation8 + $0x10] sm:$0xff]
        %v1021 = vld [vmem:[#allocation8 + $0x18] sm:$0xff]
        %v1022 = vld [vmem:[#allocation8 + $0x20] sm:$0xff]
        %v1023 = vld [vmem:[#allocation8 + $0x28] sm:$0xff]
        %v1024 = vld [vmem:[#allocation8 + $0x30] sm:$0xff]
        %v1025 = vld [vmem:[#allocation8 + $0x38] sm:$0xff]
        %v1026 = vld [vmem:[#allocation8 + $0x40] sm:$0xff]
        %v1027 = vld [vmem:[#allocation8 + $0x48] sm:$0xff]
        %v1028 = vld [vmem:[#allocation8 + $0x50] sm:$0xff]
        %v1029 = vld [vmem:[#allocation8 + $0x58] sm:$0xff]
        %v1030 = vld [vmem:[#allocation8 + $0x60] sm:$0xff]
        %v1031 = vld [vmem:[#allocation8 + $0x68] sm:$0xff]
        %v1032 = vld [vmem:[#allocation8 + $0x70] sm:$0xff]
        %v1033 = vld [vmem:[#allocation8 + $0x78] sm:$0xff]
        %v1034 = vld [vmem:[#allocation3 + $0x4] sm:$0x1]
        %s1035 = scalar_lea.vmem [#allocation8], 128
        %v1036 = vld [vmem:[%s1035] sm:$0xff]
        %v1037 = vld [vmem:[%s1035 + $0x8] sm:$0xff]
        %v1038 = vld [vmem:[%s1035 + $0x10] sm:$0xff]
        %v1039 = vld [vmem:[%s1035 + $0x18] sm:$0xff]
        %v1040 = vld [vmem:[%s1035 + $0x20] sm:$0xff]
        %v1041 = vld [vmem:[%s1035 + $0x28] sm:$0xff]
        %v1042 = vld [vmem:[%s1035 + $0x30] sm:$0xff]
        %v1043 = vld [vmem:[%s1035 + $0x38] sm:$0xff]
        %v1044 = vld [vmem:[%s1035 + $0x40] sm:$0xff]
        %v1045 = vld [vmem:[%s1035 + $0x48] sm:$0xff]
        %v1046 = vld [vmem:[%s1035 + $0x50] sm:$0xff]
        %v1047 = vld [vmem:[%s1035 + $0x58] sm:$0xff]
        %v1048 = vld [vmem:[%s1035 + $0x60] sm:$0xff]
        %v1049 = vld [vmem:[%s1035 + $0x68] sm:$0xff]
        %v1050 = vld [vmem:[%s1035 + $0x70] sm:$0xff]
        %v1051 = vld [vmem:[%s1035 + $0x78] sm:$0xff]
        %v1054 = vunpack.c.l.b16 %v1017
        %v1055 = vunpack.c.l.b16 %v1034
        %v1056 = vpack.c.b16 %v1055, %v1054
        %v1058 = vshrl.u32 %v1056, 16
        %v1060 = vshll.u32 %v1056, 16
        %v1062 = vrot.slane %v1060, 1
        %v1063 = vor.u32 %v1058, %v1062
        %v1081 = vunpack.c.l.b16 %v1036
        %v1082 = vunpack.c.h.b16 %v1036
        %v1083 = vunpack.c.l.b16 %v1037
        %v1084 = vunpack.c.h.b16 %v1037
        %v1085 = vunpack.c.l.b16 %v1038
        %v1086 = vunpack.c.h.b16 %v1038
        %v1087 = vunpack.c.l.b16 %v1039
        %v1088 = vunpack.c.h.b16 %v1039
        %v1089 = vunpack.c.l.b16 %v1040
        %v1090 = vunpack.c.h.b16 %v1040
        %v1091 = vunpack.c.l.b16 %v1041
        %v1092 = vunpack.c.h.b16 %v1041
        %v1093 = vunpack.c.l.b16 %v1042
        %v1094 = vunpack.c.h.b16 %v1042
        %v1095 = vunpack.c.l.b16 %v1043
        %v1096 = vunpack.c.h.b16 %v1043
        %v1097 = vunpack.c.l.b16 %v1044
        %v1098 = vunpack.c.h.b16 %v1044
        %v1099 = vunpack.c.l.b16 %v1045
        %v1100 = vunpack.c.h.b16 %v1045
        %v1101 = vunpack.c.l.b16 %v1046
        %v1102 = vunpack.c.h.b16 %v1046
        %v1103 = vunpack.c.l.b16 %v1047
        %v1104 = vunpack.c.h.b16 %v1047
        %v1105 = vunpack.c.l.b16 %v1048
        %v1106 = vunpack.c.h.b16 %v1048
        %v1107 = vunpack.c.l.b16 %v1049
        %v1108 = vunpack.c.h.b16 %v1049
        %v1109 = vunpack.c.l.b16 %v1050
        %v1110 = vunpack.c.h.b16 %v1050
        %v1111 = vunpack.c.l.b16 %v1051
        %v1112 = vunpack.c.h.b16 %v1051
        %v1113 = vpack.c.b16 %v1083, %v1081
        %v1114 = vpack.c.b16 %v1084, %v1082
        %v1115 = vpack.c.b16 %v1087, %v1085
        %v1116 = vpack.c.b16 %v1088, %v1086
        %v1117 = vpack.c.b16 %v1091, %v1089
        %v1118 = vpack.c.b16 %v1092, %v1090
        %v1119 = vpack.c.b16 %v1095, %v1093
        %v1120 = vpack.c.b16 %v1096, %v1094
        %v1121 = vpack.c.b16 %v1099, %v1097
        %v1122 = vpack.c.b16 %v1100, %v1098
        %v1123 = vpack.c.b16 %v1103, %v1101
        %v1124 = vpack.c.b16 %v1104, %v1102
        %v1125 = vpack.c.b16 %v1107, %v1105
        %v1126 = vpack.c.b16 %v1108, %v1106
        %v1127 = vpack.c.b16 %v1111, %v1109
        %v1128 = vpack.c.b16 %v1112, %v1110
        %1145 = vmatprep.subr.bf16.mxu0 %v1114
        %1146 = vmatpush1.bf16.msra.mxu0 %v1113
        %1147 = vmatprep.subr.bf16.mxu0 %v1116
        %1148 = vmatpush1.bf16.msra.mxu0 %v1115
        %1149 = vmatprep.subr.bf16.mxu0 %v1118
        %1150 = vmatpush1.bf16.msra.mxu0 %v1117
        %1151 = vmatprep.subr.bf16.mxu0 %v1120
        %1152 = vmatpush1.bf16.msra.mxu0 %v1119
        %1153 = vmatprep.subr.bf16.mxu0 %v1122
        %1154 = vmatpush1.bf16.msra.mxu0 %v1121
        %1155 = vmatprep.subr.bf16.mxu0 %v1124
        %1156 = vmatpush1.bf16.msra.mxu0 %v1123
        %1157 = vmatprep.subr.bf16.mxu0 %v1126
        %1158 = vmatpush1.bf16.msra.mxu0 %v1125
        %1159 = vmatprep.subr.bf16.mxu0 %v1128
        %1160 = vmatpush1.bf16.msra.mxu0 %v1127
        %1161 = vmatprep.subr.bf16.mxu0 0
        %1162 = vmatpush1.bf16.msra.mxu0 0
        %1163 = vmatprep.subr.bf16.mxu0 0
        %1164 = vmatpush1.bf16.msra.mxu0 0
        %1165 = vmatprep.subr.bf16.mxu0 0
        %1166 = vmatpush1.bf16.msra.mxu0 0
        %1167 = vmatprep.subr.bf16.mxu0 0
        %1168 = vmatpush1.bf16.msra.mxu0 0
        %1169 = vmatprep.subr.bf16.mxu0 0
        %1170 = vmatpush1.bf16.msra.mxu0 0
        %1171 = vmatprep.subr.bf16.mxu0 0
        %1172 = vmatpush1.bf16.msra.mxu0 0
        %1173 = vmatprep.subr.bf16.mxu0 0
        %1174 = vmatpush1.bf16.msra.mxu0 0
        %1175 = vmatprep.subr.bf16.mxu0 0
        %1176 = vmatpush1.bf16.msra.mxu0 0
        %1177 = vmatprep.mubr.bf16.mxu0 0
        %1178 = vmatmul.mubr.bf16.gmra.mrb[0].mxu0 %v1063
        %v1179 = vpop.f32.mrb[0].mxu0
        %v1180 = vadd.f32 0.0, %v1179
        %v1181 = vpop.f32.mrb[0].mxu0
        %v1182 = vadd.f32 0.0, %v1181
        %v1183 = vpop.f32.mrb[0].mxu0
        %v1184 = vpop.f32.mrb[0].mxu0
        %1185 = vdwg.mxu0
        %v1202 = vunpack.c.l.b16 %v1018
        %v1203 = vunpack.c.h.b16 %v1018
        %v1204 = vunpack.c.l.b16 %v1019
        %v1205 = vunpack.c.h.b16 %v1019
        %v1206 = vunpack.c.l.b16 %v1020
        %v1207 = vunpack.c.h.b16 %v1020
        %v1208 = vunpack.c.l.b16 %v1021
        %v1209 = vunpack.c.h.b16 %v1021
        %v1210 = vunpack.c.l.b16 %v1022
        %v1211 = vunpack.c.h.b16 %v1022
        %v1212 = vunpack.c.l.b16 %v1023
        %v1213 = vunpack.c.h.b16 %v1023
        %v1214 = vunpack.c.l.b16 %v1024
        %v1215 = vunpack.c.h.b16 %v1024
        %v1216 = vunpack.c.l.b16 %v1025
        %v1217 = vunpack.c.h.b16 %v1025
        %v1218 = vunpack.c.l.b16 %v1026
        %v1219 = vunpack.c.h.b16 %v1026
        %v1220 = vunpack.c.l.b16 %v1027
        %v1221 = vunpack.c.h.b16 %v1027
        %v1222 = vunpack.c.l.b16 %v1028
        %v1223 = vunpack.c.h.b16 %v1028
        %v1224 = vunpack.c.l.b16 %v1029
        %v1225 = vunpack.c.h.b16 %v1029
        %v1226 = vunpack.c.l.b16 %v1030
        %v1227 = vunpack.c.h.b16 %v1030
        %v1228 = vunpack.c.l.b16 %v1031
        %v1229 = vunpack.c.h.b16 %v1031
        %v1230 = vunpack.c.l.b16 %v1032
        %v1231 = vunpack.c.h.b16 %v1032
        %v1232 = vunpack.c.l.b16 %v1033
        %v1233 = vunpack.c.h.b16 %v1033
        %v1234 = vpack.c.b16 %v1204, %v1202
        %v1235 = vpack.c.b16 %v1205, %v1203
        %v1236 = vpack.c.b16 %v1208, %v1206
        %v1237 = vpack.c.b16 %v1209, %v1207
        %v1238 = vpack.c.b16 %v1212, %v1210
        %v1239 = vpack.c.b16 %v1213, %v1211
        %v1240 = vpack.c.b16 %v1216, %v1214
        %v1241 = vpack.c.b16 %v1217, %v1215
        %v1242 = vpack.c.b16 %v1220, %v1218
        %v1243 = vpack.c.b16 %v1221, %v1219
        %v1244 = vpack.c.b16 %v1224, %v1222
        %v1245 = vpack.c.b16 %v1225, %v1223
        %v1246 = vpack.c.b16 %v1228, %v1226
        %v1247 = vpack.c.b16 %v1229, %v1227
        %v1248 = vpack.c.b16 %v1232, %v1230
        %v1249 = vpack.c.b16 %v1233, %v1231
        %1266 = vmatprep.subr.bf16.mxu0 %v1235
        %1267 = vmatpush1.bf16.msra.mxu0 %v1234
        %1268 = vmatprep.subr.bf16.mxu0 %v1237
        %1269 = vmatpush1.bf16.msra.mxu0 %v1236
        %1270 = vmatprep.subr.bf16.mxu0 %v1239
        %1271 = vmatpush1.bf16.msra.mxu0 %v1238
        %1272 = vmatprep.subr.bf16.mxu0 %v1241
        %1273 = vmatpush1.bf16.msra.mxu0 %v1240
        %1274 = vmatprep.subr.bf16.mxu0 %v1243
        %1275 = vmatpush1.bf16.msra.mxu0 %v1242
        %1276 = vmatprep.subr.bf16.mxu0 %v1245
        %1277 = vmatpush1.bf16.msra.mxu0 %v1244
        %1278 = vmatprep.subr.bf16.mxu0 %v1247
        %1279 = vmatpush1.bf16.msra.mxu0 %v1246
        %1280 = vmatprep.subr.bf16.mxu0 %v1249
        %1281 = vmatpush1.bf16.msra.mxu0 %v1248
        %1282 = vmatprep.subr.bf16.mxu0 0
        %1283 = vmatpush1.bf16.msra.mxu0 0
        %1284 = vmatprep.subr.bf16.mxu0 0
        %1285 = vmatpush1.bf16.msra.mxu0 0
        %1286 = vmatprep.subr.bf16.mxu0 0
        %1287 = vmatpush1.bf16.msra.mxu0 0
        %1288 = vmatprep.subr.bf16.mxu0 0
        %1289 = vmatpush1.bf16.msra.mxu0 0
        %1290 = vmatprep.subr.bf16.mxu0 0
        %1291 = vmatpush1.bf16.msra.mxu0 0
        %1292 = vmatprep.subr.bf16.mxu0 0
        %1293 = vmatpush1.bf16.msra.mxu0 0
        %1294 = vmatprep.subr.bf16.mxu0 0
        %1295 = vmatpush1.bf16.msra.mxu0 0
        %1296 = vmatprep.subr.bf16.mxu0 0
        %1297 = vmatpush1.bf16.msra.mxu0 0
        %1298 = vmatprep.mubr.bf16.mxu0 0
        %1299 = vmatmul.mubr.bf16.gmra.mrb[0].mxu0 %v1017
        %v1300 = vpop.f32.mrb[0].mxu0
        %v1301 = vadd.f32 %v1180, %v1300
        %v1302 = vpop.f32.mrb[0].mxu0
        %v1303 = vadd.f32 %v1182, %v1302
        %v1304 = vpop.f32.mrb[0].mxu0
        %v1305 = vpop.f32.mrb[0].mxu0
        %1306 = vdwg.mxu0
        %v1307 = vld [vmem:[#allocation3] sm:$0xe]
        %s1308 = scalar_lea.vmem [#allocation8], 256
        %v1309 = vld [vmem:[%s1308] sm:$0xff]
        %v1310 = vld [vmem:[%s1308 + $0x8] sm:$0xff]
        %v1311 = vld [vmem:[%s1308 + $0x10] sm:$0xff]
        %v1312 = vld [vmem:[%s1308 + $0x18] sm:$0xff]
        %v1313 = vld [vmem:[%s1308 + $0x20] sm:$0xff]
        %v1314 = vld [vmem:[%s1308 + $0x28] sm:$0xff]
        %v1315 = vld [vmem:[%s1308 + $0x30] sm:$0xff]
        %v1316 = vld [vmem:[%s1308 + $0x38] sm:$0xff]
        %v1317 = vld [vmem:[%s1308 + $0x40] sm:$0xff]
        %v1318 = vld [vmem:[%s1308 + $0x48] sm:$0xff]
        %v1319 = vld [vmem:[%s1308 + $0x50] sm:$0xff]
        %v1320 = vld [vmem:[%s1308 + $0x58] sm:$0xff]
        %v1321 = vld [vmem:[%s1308 + $0x60] sm:$0xff]
        %v1322 = vld [vmem:[%s1308 + $0x68] sm:$0xff]
        %v1323 = vld [vmem:[%s1308 + $0x70] sm:$0xff]
        %v1324 = vld [vmem:[%s1308 + $0x78] sm:$0xff]
        %v1326 = vunpack.c.l.b16 %v1307
        %v1327 = vpack.c.b16 %v1055, %v1326
        %v1328 = vrot.slane %v1327, 1
        %v1346 = vunpack.c.l.b16 %v1309
        %v1347 = vunpack.c.h.b16 %v1309
        %v1348 = vunpack.c.l.b16 %v1310
        %v1349 = vunpack.c.h.b16 %v1310
        %v1350 = vunpack.c.l.b16 %v1311
        %v1351 = vunpack.c.h.b16 %v1311
        %v1352 = vunpack.c.l.b16 %v1312
        %v1353 = vunpack.c.h.b16 %v1312
        %v1354 = vunpack.c.l.b16 %v1313
        %v1355 = vunpack.c.h.b16 %v1313
        %v1356 = vunpack.c.l.b16 %v1314
        %v1357 = vunpack.c.h.b16 %v1314
        %v1358 = vunpack.c.l.b16 %v1315
        %v1359 = vunpack.c.h.b16 %v1315
        %v1360 = vunpack.c.l.b16 %v1316
        %v1361 = vunpack.c.h.b16 %v1316
        %v1362 = vunpack.c.l.b16 %v1317
        %v1363 = vunpack.c.h.b16 %v1317
        %v1364 = vunpack.c.l.b16 %v1318
        %v1365 = vunpack.c.h.b16 %v1318
        %v1366 = vunpack.c.l.b16 %v1319
        %v1367 = vunpack.c.h.b16 %v1319
        %v1368 = vunpack.c.l.b16 %v1320
        %v1369 = vunpack.c.h.b16 %v1320
        %v1370 = vunpack.c.l.b16 %v1321
        %v1371 = vunpack.c.h.b16 %v1321
        %v1372 = vunpack.c.l.b16 %v1322
        %v1373 = vunpack.c.h.b16 %v1322
        %v1374 = vunpack.c.l.b16 %v1323
        %v1375 = vunpack.c.h.b16 %v1323
        %v1376 = vunpack.c.l.b16 %v1324
        %v1377 = vunpack.c.h.b16 %v1324
        %v1378 = vpack.c.b16 %v1348, %v1346
        %v1379 = vpack.c.b16 %v1349, %v1347
        %v1380 = vpack.c.b16 %v1352, %v1350
        %v1381 = vpack.c.b16 %v1353, %v1351
        %v1382 = vpack.c.b16 %v1356, %v1354
        %v1383 = vpack.c.b16 %v1357, %v1355
        %v1384 = vpack.c.b16 %v1360, %v1358
        %v1385 = vpack.c.b16 %v1361, %v1359
        %v1386 = vpack.c.b16 %v1364, %v1362
        %v1387 = vpack.c.b16 %v1365, %v1363
        %v1388 = vpack.c.b16 %v1368, %v1366
        %v1389 = vpack.c.b16 %v1369, %v1367
        %v1390 = vpack.c.b16 %v1372, %v1370
        %v1391 = vpack.c.b16 %v1373, %v1371
        %v1392 = vpack.c.b16 %v1376, %v1374
        %v1393 = vpack.c.b16 %v1377, %v1375
        %1410 = vmatprep.subr.bf16.mxu0 %v1379
        %1411 = vmatpush1.bf16.msra.mxu0 %v1378
        %1412 = vmatprep.subr.bf16.mxu0 %v1381
        %1413 = vmatpush1.bf16.msra.mxu0 %v1380
        %1414 = vmatprep.subr.bf16.mxu0 %v1383
        %1415 = vmatpush1.bf16.msra.mxu0 %v1382
        %1416 = vmatprep.subr.bf16.mxu0 %v1385
        %1417 = vmatpush1.bf16.msra.mxu0 %v1384
        %1418 = vmatprep.subr.bf16.mxu0 %v1387
        %1419 = vmatpush1.bf16.msra.mxu0 %v1386
        %1420 = vmatprep.subr.bf16.mxu0 %v1389
        %1421 = vmatpush1.bf16.msra.mxu0 %v1388
        %1422 = vmatprep.subr.bf16.mxu0 %v1391
        %1423 = vmatpush1.bf16.msra.mxu0 %v1390
        %1424 = vmatprep.subr.bf16.mxu0 %v1393
        %1425 = vmatpush1.bf16.msra.mxu0 %v1392
        %1426 = vmatprep.subr.bf16.mxu0 0
        %1427 = vmatpush1.bf16.msra.mxu0 0
        %1428 = vmatprep.subr.bf16.mxu0 0
        %1429 = vmatpush1.bf16.msra.mxu0 0
        %1430 = vmatprep.subr.bf16.mxu0 0
        %1431 = vmatpush1.bf16.msra.mxu0 0
        %1432 = vmatprep.subr.bf16.mxu0 0
        %1433 = vmatpush1.bf16.msra.mxu0 0
        %1434 = vmatprep.subr.bf16.mxu0 0
        %1435 = vmatpush1.bf16.msra.mxu0 0
        %1436 = vmatprep.subr.bf16.mxu0 0
        %1437 = vmatpush1.bf16.msra.mxu0 0
        %1438 = vmatprep.subr.bf16.mxu0 0
        %1439 = vmatpush1.bf16.msra.mxu0 0
        %1440 = vmatprep.subr.bf16.mxu0 0
        %1441 = vmatpush1.bf16.msra.mxu0 0
        %1442 = vmatprep.mubr.bf16.mxu0 0
        %1443 = vmatmul.mubr.bf16.gmra.mrb[0].mxu0 %v1328
        %v1444 = vpop.f32.mrb[0].mxu0
        %v1445 = vadd.f32 0.0, %v1444
        %v1446 = vpop.f32.mrb[0].mxu0
        %v1447 = vadd.f32 0.0, %v1446
        %v1448 = vpop.f32.mrb[0].mxu0
        %v1449 = vpop.f32.mrb[0].mxu0
        %1450 = vdwg.mxu0
        %v1451 = vadd.f32 %v1301, %v1445
        %v1452 = vadd.f32 %v1303, %v1447
        %v1453 = vld [vmem:[#allocation3 + $0x4] sm:$0x3]
        %s1454 = scalar_lea.vmem [#allocation8], 384
        %v1455 = vld [vmem:[%s1454] sm:$0xff]
        %v1456 = vld [vmem:[%s1454 + $0x8] sm:$0xff]
        %v1457 = vld [vmem:[%s1454 + $0x10] sm:$0xff]
        %v1458 = vld [vmem:[%s1454 + $0x18] sm:$0xff]
        %v1459 = vld [vmem:[%s1454 + $0x20] sm:$0xff]
        %v1460 = vld [vmem:[%s1454 + $0x28] sm:$0xff]
        %v1461 = vld [vmem:[%s1454 + $0x30] sm:$0xff]
        %v1462 = vld [vmem:[%s1454 + $0x38] sm:$0xff]
        %v1463 = vld [vmem:[%s1454 + $0x40] sm:$0xff]
        %v1464 = vld [vmem:[%s1454 + $0x48] sm:$0xff]
        %v1465 = vld [vmem:[%s1454 + $0x50] sm:$0xff]
        %v1466 = vld [vmem:[%s1454 + $0x58] sm:$0xff]
        %v1467 = vld [vmem:[%s1454 + $0x60] sm:$0xff]
        %v1468 = vld [vmem:[%s1454 + $0x68] sm:$0xff]
        %v1469 = vld [vmem:[%s1454 + $0x70] sm:$0xff]
        %v1470 = vld [vmem:[%s1454 + $0x78] sm:$0xff]
        %v1472 = vunpack.c.l.b16 %v1453
        %v1473 = vpack.c.b16 %v1472, %v1326
        %v1475 = vshrl.u32 %v1473, 16
        %v1477 = vrot.slane %v1475, 1
        %v1478 = vshll.u32 %v1473, 16
        %v1480 = vrot.slane %v1478, 2
        %v1481 = vor.u32 %v1477, %v1480
        %v1499 = vunpack.c.l.b16 %v1455
        %v1500 = vunpack.c.h.b16 %v1455
        %v1501 = vunpack.c.l.b16 %v1456
        %v1502 = vunpack.c.h.b16 %v1456
        %v1503 = vunpack.c.l.b16 %v1457
        %v1504 = vunpack.c.h.b16 %v1457
        %v1505 = vunpack.c.l.b16 %v1458
        %v1506 = vunpack.c.h.b16 %v1458
        %v1507 = vunpack.c.l.b16 %v1459
        %v1508 = vunpack.c.h.b16 %v1459
        %v1509 = vunpack.c.l.b16 %v1460
        %v1510 = vunpack.c.h.b16 %v1460
        %v1511 = vunpack.c.l.b16 %v1461
        %v1512 = vunpack.c.h.b16 %v1461
        %v1513 = vunpack.c.l.b16 %v1462
        %v1514 = vunpack.c.h.b16 %v1462
        %v1515 = vunpack.c.l.b16 %v1463
        %v1516 = vunpack.c.h.b16 %v1463
        %v1517 = vunpack.c.l.b16 %v1464
        %v1518 = vunpack.c.h.b16 %v1464
        %v1519 = vunpack.c.l.b16 %v1465
        %v1520 = vunpack.c.h.b16 %v1465
        %v1521 = vunpack.c.l.b16 %v1466
        %v1522 = vunpack.c.h.b16 %v1466
        %v1523 = vunpack.c.l.b16 %v1467
        %v1524 = vunpack.c.h.b16 %v1467
        %v1525 = vunpack.c.l.b16 %v1468
        %v1526 = vunpack.c.h.b16 %v1468
        %v1527 = vunpack.c.l.b16 %v1469
        %v1528 = vunpack.c.h.b16 %v1469
        %v1529 = vunpack.c.l.b16 %v1470
        %v1530 = vunpack.c.h.b16 %v1470
        %v1531 = vpack.c.b16 %v1501, %v1499
        %v1532 = vpack.c.b16 %v1502, %v1500
        %v1533 = vpack.c.b16 %v1505, %v1503
        %v1534 = vpack.c.b16 %v1506, %v1504
        %v1535 = vpack.c.b16 %v1509, %v1507
        %v1536 = vpack.c.b16 %v1510, %v1508
        %v1537 = vpack.c.b16 %v1513, %v1511
        %v1538 = vpack.c.b16 %v1514, %v1512
        %v1539 = vpack.c.b16 %v1517, %v1515
        %v1540 = vpack.c.b16 %v1518, %v1516
        %v1541 = vpack.c.b16 %v1521, %v1519
        %v1542 = vpack.c.b16 %v1522, %v1520
        %v1543 = vpack.c.b16 %v1525, %v1523
        %v1544 = vpack.c.b16 %v1526, %v1524
        %v1545 = vpack.c.b16 %v1529, %v1527
        %v1546 = vpack.c.b16 %v1530, %v1528
        %1563 = vmatprep.subr.bf16.mxu0 %v1532
        %1564 = vmatpush1.bf16.msra.mxu0 %v1531
        %1565 = vmatprep.subr.bf16.mxu0 %v1534
        %1566 = vmatpush1.bf16.msra.mxu0 %v1533
        %1567 = vmatprep.subr.bf16.mxu0 %v1536
        %1568 = vmatpush1.bf16.msra.mxu0 %v1535
        %1569 = vmatprep.subr.bf16.mxu0 %v1538
        %1570 = vmatpush1.bf16.msra.mxu0 %v1537
        %1571 = vmatprep.subr.bf16.mxu0 %v1540
        %1572 = vmatpush1.bf16.msra.mxu0 %v1539
        %1573 = vmatprep.subr.bf16.mxu0 %v1542
        %1574 = vmatpush1.bf16.msra.mxu0 %v1541
        %1575 = vmatprep.subr.bf16.mxu0 %v1544
        %1576 = vmatpush1.bf16.msra.mxu0 %v1543
        %1577 = vmatprep.subr.bf16.mxu0 %v1546
        %1578 = vmatpush1.bf16.msra.mxu0 %v1545
        %1579 = vmatprep.subr.bf16.mxu0 0
        %1580 = vmatpush1.bf16.msra.mxu0 0
        %1581 = vmatprep.subr.bf16.mxu0 0
        %1582 = vmatpush1.bf16.msra.mxu0 0
        %1583 = vmatprep.subr.bf16.mxu0 0
        %1584 = vmatpush1.bf16.msra.mxu0 0
        %1585 = vmatprep.subr.bf16.mxu0 0
        %1586 = vmatpush1.bf16.msra.mxu0 0
        %1587 = vmatprep.subr.bf16.mxu0 0
        %1588 = vmatpush1.bf16.msra.mxu0 0
        %1589 = vmatprep.subr.bf16.mxu0 0
        %1590 = vmatpush1.bf16.msra.mxu0 0
        %1591 = vmatprep.subr.bf16.mxu0 0
        %1592 = vmatpush1.bf16.msra.mxu0 0
        %1593 = vmatprep.subr.bf16.mxu0 0
        %1594 = vmatpush1.bf16.msra.mxu0 0
        %1595 = vmatprep.mubr.bf16.mxu0 0
        %1596 = vmatmul.mubr.bf16.gmra.mrb[0].mxu0 %v1481
        %v1597 = vpop.f32.mrb[0].mxu0
        %v1598 = vadd.f32 0.0, %v1597
        %v1599 = vpop.f32.mrb[0].mxu0
        %v1600 = vadd.f32 0.0, %v1599
        %v1601 = vpop.f32.mrb[0].mxu0
        %v1602 = vpop.f32.mrb[0].mxu0
        %1603 = vdwg.mxu0
        %v1604 = vadd.f32 %v1451, %v1598
        %v1605 = vadd.f32 %v1452, %v1600
        %v1606 = vld [vmem:[#allocation3] sm:$0xc]
        %s1607 = scalar_lea.vmem [#allocation8], 512
        %v1608 = vld [vmem:[%s1607] sm:$0xff]
        %v1609 = vld [vmem:[%s1607 + $0x8] sm:$0xff]
        %v1610 = vld [vmem:[%s1607 + $0x10] sm:$0xff]
        %v1611 = vld [vmem:[%s1607 + $0x18] sm:$0xff]
        %v1612 = vld [vmem:[%s1607 + $0x20] sm:$0xff]
        %v1613 = vld [vmem:[%s1607 + $0x28] sm:$0xff]
        %v1614 = vld [vmem:[%s1607 + $0x30] sm:$0xff]
        %v1615 = vld [vmem:[%s1607 + $0x38] sm:$0xff]
        %v1616 = vld [vmem:[%s1607 + $0x40] sm:$0xff]
        %v1617 = vld [vmem:[%s1607 + $0x48] sm:$0xff]
        %v1618 = vld [vmem:[%s1607 + $0x50] sm:$0xff]
        %v1619 = vld [vmem:[%s1607 + $0x58] sm:$0xff]
        %v1620 = vld [vmem:[%s1607 + $0x60] sm:$0xff]
        %v1621 = vld [vmem:[%s1607 + $0x68] sm:$0xff]
        %v1622 = vld [vmem:[%s1607 + $0x70] sm:$0xff]
        %v1623 = vld [vmem:[%s1607 + $0x78] sm:$0xff]
        %v1625 = vunpack.c.l.b16 %v1606
        %v1626 = vpack.c.b16 %v1472, %v1625
        %v1627 = vrot.slane %v1626, 2
        %v1645 = vunpack.c.l.b16 %v1608
        %v1646 = vunpack.c.h.b16 %v1608
        %v1647 = vunpack.c.l.b16 %v1609
        %v1648 = vunpack.c.h.b16 %v1609
        %v1649 = vunpack.c.l.b16 %v1610
        %v1650 = vunpack.c.h.b16 %v1610
        %v1651 = vunpack.c.l.b16 %v1611
        %v1652 = vunpack.c.h.b16 %v1611
        %v1653 = vunpack.c.l.b16 %v1612
        %v1654 = vunpack.c.h.b16 %v1612
        %v1655 = vunpack.c.l.b16 %v1613
        %v1656 = vunpack.c.h.b16 %v1613
        %v1657 = vunpack.c.l.b16 %v1614
        %v1658 = vunpack.c.h.b16 %v1614
        %v1659 = vunpack.c.l.b16 %v1615
        %v1660 = vunpack.c.h.b16 %v1615
        %v1661 = vunpack.c.l.b16 %v1616
        %v1662 = vunpack.c.h.b16 %v1616
        %v1663 = vunpack.c.l.b16 %v1617
        %v1664 = vunpack.c.h.b16 %v1617
        %v1665 = vunpack.c.l.b16 %v1618
        %v1666 = vunpack.c.h.b16 %v1618
        %v1667 = vunpack.c.l.b16 %v1619
        %v1668 = vunpack.c.h.b16 %v1619
        %v1669 = vunpack.c.l.b16 %v1620
        %v1670 = vunpack.c.h.b16 %v1620
        %v1671 = vunpack.c.l.b16 %v1621
        %v1672 = vunpack.c.h.b16 %v1621
        %v1673 = vunpack.c.l.b16 %v1622
        %v1674 = vunpack.c.h.b16 %v1622
        %v1675 = vunpack.c.l.b16 %v1623
        %v1676 = vunpack.c.h.b16 %v1623
        %v1677 = vpack.c.b16 %v1647, %v1645
        %v1678 = vpack.c.b16 %v1648, %v1646
        %v1679 = vpack.c.b16 %v1651, %v1649
        %v1680 = vpack.c.b16 %v1652, %v1650
        %v1681 = vpack.c.b16 %v1655, %v1653
        %v1682 = vpack.c.b16 %v1656, %v1654
        %v1683 = vpack.c.b16 %v1659, %v1657
        %v1684 = vpack.c.b16 %v1660, %v1658
        %v1685 = vpack.c.b16 %v1663, %v1661
        %v1686 = vpack.c.b16 %v1664, %v1662
        %v1687 = vpack.c.b16 %v1667, %v1665
        %v1688 = vpack.c.b16 %v1668, %v1666
        %v1689 = vpack.c.b16 %v1671, %v1669
        %v1690 = vpack.c.b16 %v1672, %v1670
        %v1691 = vpack.c.b16 %v1675, %v1673
        %v1692 = vpack.c.b16 %v1676, %v1674
        %1709 = vmatprep.subr.bf16.mxu0 %v1678
        %1710 = vmatpush1.bf16.msra.mxu0 %v1677
        %1711 = vmatprep.subr.bf16.mxu0 %v1680
        %1712 = vmatpush1.bf16.msra.mxu0 %v1679
        %1713 = vmatprep.subr.bf16.mxu0 %v1682
        %1714 = vmatpush1.bf16.msra.mxu0 %v1681
        %1715 = vmatprep.subr.bf16.mxu0 %v1684
        %1716 = vmatpush1.bf16.msra.mxu0 %v1683
        %1717 = vmatprep.subr.bf16.mxu0 %v1686
        %1718 = vmatpush1.bf16.msra.mxu0 %v1685
        %1719 = vmatprep.subr.bf16.mxu0 %v1688
        %1720 = vmatpush1.bf16.msra.mxu0 %v1687
        %1721 = vmatprep.subr.bf16.mxu0 %v1690
        %1722 = vmatpush1.bf16.msra.mxu0 %v1689
        %1723 = vmatprep.subr.bf16.mxu0 %v1692
        %1724 = vmatpush1.bf16.msra.mxu0 %v1691
        %1725 = vmatprep.subr.bf16.mxu0 0
        %1726 = vmatpush1.bf16.msra.mxu0 0
        %1727 = vmatprep.subr.bf16.mxu0 0
        %1728 = vmatpush1.bf16.msra.mxu0 0
        %1729 = vmatprep.subr.bf16.mxu0 0
        %1730 = vmatpush1.bf16.msra.mxu0 0
        %1731 = vmatprep.subr.bf16.mxu0 0
        %1732 = vmatpush1.bf16.msra.mxu0 0
        %1733 = vmatprep.subr.bf16.mxu0 0
        %1734 = vmatpush1.bf16.msra.mxu0 0
        %1735 = vmatprep.subr.bf16.mxu0 0
        %1736 = vmatpush1.bf16.msra.mxu0 0
        %1737 = vmatprep.subr.bf16.mxu0 0
        %1738 = vmatpush1.bf16.msra.mxu0 0
        %1739 = vmatprep.subr.bf16.mxu0 0
        %1740 = vmatpush1.bf16.msra.mxu0 0
        %1741 = vmatprep.mubr.bf16.mxu0 0
        %1742 = vmatmul.mubr.bf16.gmra.mrb[0].mxu0 %v1627
        %v1743 = vpop.f32.mrb[0].mxu0
        %v1744 = vadd.f32 0.0, %v1743
        %v1745 = vpop.f32.mrb[0].mxu0
        %v1746 = vadd.f32 0.0, %v1745
        %v1747 = vpop.f32.mrb[0].mxu0
        %v1748 = vpop.f32.mrb[0].mxu0
        %1749 = vdwg.mxu0
        %v1750 = vadd.f32 %v1604, %v1744
        %v1751 = vadd.f32 %v1605, %v1746
        %v1752 = vld [vmem:[#allocation10] sm:$0x3]
        %v1754 = vlaneseq
        %v1755 = vshrl.u32 %v1754, 7
        %v1756 = vsub.s32 0, %v1755
        %v1757 = vrot.slane %v1752, %v1756
        %v1758 = vlaneseq
        %v1759 = vshrl.u32 %v1758, 7
        %v1760 = vsub.s32 1, %v1759
        %v1761 = vrot.slane %v1752, %v1760
        %v1764 = vadd.f32 %v1750, %v1757
        %v1765 = vadd.f32 %v1751, %v1761
        %v1766 = vmax.f32 %v1764, 0.0
        %v1767 = vmax.f32 %v1765, 0.0
        %v1768 = vmax.f32 %v1766, %v1767
        %1769 = vst [vmem:[#allocation4] sm:$0xff] %v1768
        %v1770 = vld [vmem:[#allocation4] ss:$8 sm:$0x1]
        %s1771 = scalar_lea.vmem [#allocation4], 1
        %v1772 = vld [vmem:[%s1771] ss:$8 sm:$0x1]
        %v1773 = vmax.f32 %v1770, %v1772
        %v1774 = vpack.c.bf16 %v1773, %v1773
        %v1775 = vld [vmem:[%s5] sm:$0xf]
        %v1776 = vld [vmem:[%s5 + $0x4] sm:$0xf]
        %v1777 = vld [vmem:[%s5 + $0x8] sm:$0xf]
        %v1778 = vld [vmem:[%s5 + $0xc] sm:$0xf]
        %v1779 = vld [vmem:[%s5 + $0x10] sm:$0xf]
        %v1780 = vld [vmem:[%s5 + $0x14] sm:$0xf]
        %v1781 = vld [vmem:[%s5 + $0x18] sm:$0xf]
        %v1782 = vld [vmem:[%s5 + $0x1c] sm:$0xf]
        %v1783 = vld [vmem:[%s5 + $0x20] sm:$0xf]
        %v1784 = vld [vmem:[%s5 + $0x24] sm:$0xf]
        %v1785 = vld [vmem:[%s5 + $0x28] sm:$0xf]
        %v1786 = vld [vmem:[%s5 + $0x2c] sm:$0xf]
        %v1787 = vld [vmem:[%s5 + $0x30] sm:$0xf]
        %v1788 = vld [vmem:[%s5 + $0x34] sm:$0xf]
        %v1789 = vld [vmem:[%s5 + $0x38] sm:$0xf]
        %v1790 = vld [vmem:[%s5 + $0x3c] sm:$0xf]
        %s1791 = scalar_lea.vmem [#allocation4], 2
        %v1792 = vld [vmem:[%s1791] ss:$8 sm:$0x1]
        %s1793 = scalar_lea.vmem [#allocation4], 3
        %v1794 = vld [vmem:[%s1793] ss:$8 sm:$0x1]
        %v1795 = vmax.f32 %v1792, %v1794
        %v1796 = vpack.c.bf16 %v1795, %v1795
        %s1797 = scalar_lea.vmem %s5, 64
        %v1798 = vld [vmem:[%s1797] sm:$0xf]
        %v1799 = vld [vmem:[%s1797 + $0x4] sm:$0xf]
        %v1800 = vld [vmem:[%s1797 + $0x8] sm:$0xf]
        %v1801 = vld [vmem:[%s1797 + $0xc] sm:$0xf]
        %v1802 = vld [vmem:[%s1797 + $0x10] sm:$0xf]
        %v1803 = vld [vmem:[%s1797 + $0x14] sm:$0xf]
        %v1804 = vld [vmem:[%s1797 + $0x18] sm:$0xf]
        %v1805 = vld [vmem:[%s1797 + $0x1c] sm:$0xf]
        %v1806 = vld [vmem:[%s1797 + $0x20] sm:$0xf]
        %v1807 = vld [vmem:[%s1797 + $0x24] sm:$0xf]
        %v1808 = vld [vmem:[%s1797 + $0x28] sm:$0xf]
        %v1809 = vld [vmem:[%s1797 + $0x2c] sm:$0xf]
        %v1810 = vld [vmem:[%s1797 + $0x30] sm:$0xf]
        %v1811 = vld [vmem:[%s1797 + $0x34] sm:$0xf]
        %v1812 = vld [vmem:[%s1797 + $0x38] sm:$0xf]
        %v1813 = vld [vmem:[%s1797 + $0x3c] sm:$0xf]
        %v1830 = vunpack.c.l.b16 %v1798
        %v1831 = vunpack.c.l.b16 %v1799
        %v1832 = vunpack.c.l.b16 %v1800
        %v1833 = vunpack.c.l.b16 %v1801
        %v1834 = vunpack.c.l.b16 %v1802
        %v1835 = vunpack.c.l.b16 %v1803
        %v1836 = vunpack.c.l.b16 %v1804
        %v1837 = vunpack.c.l.b16 %v1805
        %v1838 = vunpack.c.l.b16 %v1806
        %v1839 = vunpack.c.l.b16 %v1807
        %v1840 = vunpack.c.l.b16 %v1808
        %v1841 = vunpack.c.l.b16 %v1809
        %v1842 = vunpack.c.l.b16 %v1810
        %v1843 = vunpack.c.l.b16 %v1811
        %v1844 = vunpack.c.l.b16 %v1812
        %v1845 = vunpack.c.l.b16 %v1813
        %v1846 = vpack.c.b16 %v1831, %v1830
        %v1847 = vpack.c.b16 %v1833, %v1832
        %v1848 = vpack.c.b16 %v1835, %v1834
        %v1849 = vpack.c.b16 %v1837, %v1836
        %v1850 = vpack.c.b16 %v1839, %v1838
        %v1851 = vpack.c.b16 %v1841, %v1840
        %v1852 = vpack.c.b16 %v1843, %v1842
        %v1853 = vpack.c.b16 %v1845, %v1844
        %1862 = vmatprep.subr.bf16.mxu0 0
        %1863 = vmatpush1.bf16.msra.mxu0 %v1846
        %1864 = vmatprep.subr.bf16.mxu0 0
        %1865 = vmatpush1.bf16.msra.mxu0 %v1847
        %1866 = vmatprep.subr.bf16.mxu0 0
        %1867 = vmatpush1.bf16.msra.mxu0 %v1848
        %1868 = vmatprep.subr.bf16.mxu0 0
        %1869 = vmatpush1.bf16.msra.mxu0 %v1849
        %1870 = vmatprep.subr.bf16.mxu0 0
        %1871 = vmatpush1.bf16.msra.mxu0 %v1850
        %1872 = vmatprep.subr.bf16.mxu0 0
        %1873 = vmatpush1.bf16.msra.mxu0 %v1851
        %1874 = vmatprep.subr.bf16.mxu0 0
        %1875 = vmatpush1.bf16.msra.mxu0 %v1852
        %1876 = vmatprep.subr.bf16.mxu0 0
        %1877 = vmatpush1.bf16.msra.mxu0 %v1853
        %1878 = vmatprep.subr.bf16.mxu0 0
        %1879 = vmatpush1.bf16.msra.mxu0 0
        %1880 = vmatprep.subr.bf16.mxu0 0
        %1881 = vmatpush1.bf16.msra.mxu0 0
        %1882 = vmatprep.subr.bf16.mxu0 0
        %1883 = vmatpush1.bf16.msra.mxu0 0
        %1884 = vmatprep.subr.bf16.mxu0 0
        %1885 = vmatpush1.bf16.msra.mxu0 0
        %1886 = vmatprep.subr.bf16.mxu0 0
        %1887 = vmatpush1.bf16.msra.mxu0 0
        %1888 = vmatprep.subr.bf16.mxu0 0
        %1889 = vmatpush1.bf16.msra.mxu0 0
        %1890 = vmatprep.subr.bf16.mxu0 0
        %1891 = vmatpush1.bf16.msra.mxu0 0
        %1892 = vmatprep.subr.bf16.mxu0 0
        %1893 = vmatpush1.bf16.msra.mxu0 0
        %1894 = vmatprep.mubr.bf16.mxu0 0
        %1895 = vmatmul.mubr.bf16.gmra.mrb[0].mxu0 %v1796
        %v1896 = vpop.f32.mrb[0].mxu0
        %v1897 = vadd.f32 0.0, %v1896
        %v1898 = vpop.f32.mrb[0].mxu0
        %v1899 = vpop.f32.mrb[0].mxu0
        %v1900 = vpop.f32.mrb[0].mxu0
        %1901 = vdwg.mxu0
        %v1918 = vunpack.c.l.b16 %v1775
        %v1919 = vunpack.c.l.b16 %v1776
        %v1920 = vunpack.c.l.b16 %v1777
        %v1921 = vunpack.c.l.b16 %v1778
        %v1922 = vunpack.c.l.b16 %v1779
        %v1923 = vunpack.c.l.b16 %v1780
        %v1924 = vunpack.c.l.b16 %v1781
        %v1925 = vunpack.c.l.b16 %v1782
        %v1926 = vunpack.c.l.b16 %v1783
        %v1927 = vunpack.c.l.b16 %v1784
        %v1928 = vunpack.c.l.b16 %v1785
        %v1929 = vunpack.c.l.b16 %v1786
        %v1930 = vunpack.c.l.b16 %v1787
        %v1931 = vunpack.c.l.b16 %v1788
        %v1932 = vunpack.c.l.b16 %v1789
        %v1933 = vunpack.c.l.b16 %v1790
        %v1934 = vpack.c.b16 %v1919, %v1918
        %v1935 = vpack.c.b16 %v1921, %v1920
        %v1936 = vpack.c.b16 %v1923, %v1922
        %v1937 = vpack.c.b16 %v1925, %v1924
        %v1938 = vpack.c.b16 %v1927, %v1926
        %v1939 = vpack.c.b16 %v1929, %v1928
        %v1940 = vpack.c.b16 %v1931, %v1930
        %v1941 = vpack.c.b16 %v1933, %v1932
        %1950 = vmatprep.subr.bf16.mxu0 0
        %1951 = vmatpush1.bf16.msra.mxu0 %v1934
        %1952 = vmatprep.subr.bf16.mxu0 0
        %1953 = vmatpush1.bf16.msra.mxu0 %v1935
        %1954 = vmatprep.subr.bf16.mxu0 0
        %1955 = vmatpush1.bf16.msra.mxu0 %v1936
        %1956 = vmatprep.subr.bf16.mxu0 0
        %1957 = vmatpush1.bf16.msra.mxu0 %v1937
        %1958 = vmatprep.subr.bf16.mxu0 0
        %1959 = vmatpush1.bf16.msra.mxu0 %v1938
        %1960 = vmatprep.subr.bf16.mxu0 0
        %1961 = vmatpush1.bf16.msra.mxu0 %v1939
        %1962 = vmatprep.subr.bf16.mxu0 0
        %1963 = vmatpush1.bf16.msra.mxu0 %v1940
        %1964 = vmatprep.subr.bf16.mxu0 0
        %1965 = vmatpush1.bf16.msra.mxu0 %v1941
        %1966 = vmatprep.subr.bf16.mxu0 0
        %1967 = vmatpush1.bf16.msra.mxu0 0
        %1968 = vmatprep.subr.bf16.mxu0 0
        %1969 = vmatpush1.bf16.msra.mxu0 0
        %1970 = vmatprep.subr.bf16.mxu0 0
        %1971 = vmatpush1.bf16.msra.mxu0 0
        %1972 = vmatprep.subr.bf16.mxu0 0
        %1973 = vmatpush1.bf16.msra.mxu0 0
        %1974 = vmatprep.subr.bf16.mxu0 0
        %1975 = vmatpush1.bf16.msra.mxu0 0
        %1976 = vmatprep.subr.bf16.mxu0 0
        %1977 = vmatpush1.bf16.msra.mxu0 0
        %1978 = vmatprep.subr.bf16.mxu0 0
        %1979 = vmatpush1.bf16.msra.mxu0 0
        %1980 = vmatprep.subr.bf16.mxu0 0
        %1981 = vmatpush1.bf16.msra.mxu0 0
        %1982 = vmatprep.mubr.bf16.mxu0 0
        %1983 = vmatmul.mubr.bf16.gmra.mrb[0].mxu0 %v1774
        %v1984 = vpop.f32.mrb[0].mxu0
        %v1985 = vadd.f32 %v1897, %v1984
        %v1986 = vpop.f32.mrb[0].mxu0
        %v1987 = vpop.f32.mrb[0].mxu0
        %v1988 = vpop.f32.mrb[0].mxu0
        %1989 = vdwg.mxu0
        %s1990 = scalar_lea.vmem [#allocation4], 4
        %v1991 = vld [vmem:[%s1990] ss:$8 sm:$0x1]
        %s1992 = scalar_lea.vmem [#allocation4], 5
        %v1993 = vld [vmem:[%s1992] ss:$8 sm:$0x1]
        %v1994 = vmax.f32 %v1991, %v1993
        %v1995 = vpack.c.bf16 %v1994, %v1994
        %s1996 = scalar_lea.vmem %s5, 128
        %v1997 = vld [vmem:[%s1996] sm:$0xf]
        %v1998 = vld [vmem:[%s1996 + $0x4] sm:$0xf]
        %v1999 = vld [vmem:[%s1996 + $0x8] sm:$0xf]
        %v2000 = vld [vmem:[%s1996 + $0xc] sm:$0xf]
        %v2001 = vld [vmem:[%s1996 + $0x10] sm:$0xf]
        %v2002 = vld [vmem:[%s1996 + $0x14] sm:$0xf]
        %v2003 = vld [vmem:[%s1996 + $0x18] sm:$0xf]
        %v2004 = vld [vmem:[%s1996 + $0x1c] sm:$0xf]
        %v2005 = vld [vmem:[%s1996 + $0x20] sm:$0xf]
        %v2006 = vld [vmem:[%s1996 + $0x24] sm:$0xf]
        %v2007 = vld [vmem:[%s1996 + $0x28] sm:$0xf]
        %v2008 = vld [vmem:[%s1996 + $0x2c] sm:$0xf]
        %v2009 = vld [vmem:[%s1996 + $0x30] sm:$0xf]
        %v2010 = vld [vmem:[%s1996 + $0x34] sm:$0xf]
        %v2011 = vld [vmem:[%s1996 + $0x38] sm:$0xf]
        %v2012 = vld [vmem:[%s1996 + $0x3c] sm:$0xf]
        %v2029 = vunpack.c.l.b16 %v1997
        %v2030 = vunpack.c.l.b16 %v1998
        %v2031 = vunpack.c.l.b16 %v1999
        %v2032 = vunpack.c.l.b16 %v2000
        %v2033 = vunpack.c.l.b16 %v2001
        %v2034 = vunpack.c.l.b16 %v2002
        %v2035 = vunpack.c.l.b16 %v2003
        %v2036 = vunpack.c.l.b16 %v2004
        %v2037 = vunpack.c.l.b16 %v2005
        %v2038 = vunpack.c.l.b16 %v2006
        %v2039 = vunpack.c.l.b16 %v2007
        %v2040 = vunpack.c.l.b16 %v2008
        %v2041 = vunpack.c.l.b16 %v2009
        %v2042 = vunpack.c.l.b16 %v2010
        %v2043 = vunpack.c.l.b16 %v2011
        %v2044 = vunpack.c.l.b16 %v2012
        %v2045 = vpack.c.b16 %v2030, %v2029
        %v2046 = vpack.c.b16 %v2032, %v2031
        %v2047 = vpack.c.b16 %v2034, %v2033
        %v2048 = vpack.c.b16 %v2036, %v2035
        %v2049 = vpack.c.b16 %v2038, %v2037
        %v2050 = vpack.c.b16 %v2040, %v2039
        %v2051 = vpack.c.b16 %v2042, %v2041
        %v2052 = vpack.c.b16 %v2044, %v2043
        %2061 = vmatprep.subr.bf16.mxu0 0
        %2062 = vmatpush1.bf16.msra.mxu0 %v2045
        %2063 = vmatprep.subr.bf16.mxu0 0
        %2064 = vmatpush1.bf16.msra.mxu0 %v2046
        %2065 = vmatprep.subr.bf16.mxu0 0
        %2066 = vmatpush1.bf16.msra.mxu0 %v2047
        %2067 = vmatprep.subr.bf16.mxu0 0
        %2068 = vmatpush1.bf16.msra.mxu0 %v2048
        %2069 = vmatprep.subr.bf16.mxu0 0
        %2070 = vmatpush1.bf16.msra.mxu0 %v2049
        %2071 = vmatprep.subr.bf16.mxu0 0
        %2072 = vmatpush1.bf16.msra.mxu0 %v2050
        %2073 = vmatprep.subr.bf16.mxu0 0
        %2074 = vmatpush1.bf16.msra.mxu0 %v2051
        %2075 = vmatprep.subr.bf16.mxu0 0
        %2076 = vmatpush1.bf16.msra.mxu0 %v2052
        %2077 = vmatprep.subr.bf16.mxu0 0
        %2078 = vmatpush1.bf16.msra.mxu0 0
        %2079 = vmatprep.subr.bf16.mxu0 0
        %2080 = vmatpush1.bf16.msra.mxu0 0
        %2081 = vmatprep.subr.bf16.mxu0 0
        %2082 = vmatpush1.bf16.msra.mxu0 0
        %2083 = vmatprep.subr.bf16.mxu0 0
        %2084 = vmatpush1.bf16.msra.mxu0 0
        %2085 = vmatprep.subr.bf16.mxu0 0
        %2086 = vmatpush1.bf16.msra.mxu0 0
        %2087 = vmatprep.subr.bf16.mxu0 0
        %2088 = vmatpush1.bf16.msra.mxu0 0
        %2089 = vmatprep.subr.bf16.mxu0 0
        %2090 = vmatpush1.bf16.msra.mxu0 0
        %2091 = vmatprep.subr.bf16.mxu0 0
        %2092 = vmatpush1.bf16.msra.mxu0 0
        %2093 = vmatprep.mubr.bf16.mxu0 0
        %2094 = vmatmul.mubr.bf16.gmra.mrb[0].mxu0 %v1995
        %v2095 = vpop.f32.mrb[0].mxu0
        %v2096 = vadd.f32 0.0, %v2095
        %v2097 = vpop.f32.mrb[0].mxu0
        %v2098 = vpop.f32.mrb[0].mxu0
        %v2099 = vpop.f32.mrb[0].mxu0
        %2100 = vdwg.mxu0
        %v2101 = vadd.f32 %v1985, %v2096
        %s2102 = scalar_lea.vmem [#allocation4], 6
        %v2103 = vld [vmem:[%s2102] ss:$8 sm:$0x1]
        %s2104 = scalar_lea.vmem [#allocation4], 7
        %v2105 = vld [vmem:[%s2104] ss:$8 sm:$0x1]
        %v2106 = vmax.f32 %v2103, %v2105
        %v2107 = vpack.c.bf16 %v2106, %v2106
        %s2108 = scalar_lea.vmem %s5, 192
        %v2109 = vld [vmem:[%s2108] sm:$0xf]
        %v2110 = vld [vmem:[%s2108 + $0x4] sm:$0xf]
        %v2111 = vld [vmem:[%s2108 + $0x8] sm:$0xf]
        %v2112 = vld [vmem:[%s2108 + $0xc] sm:$0xf]
        %v2113 = vld [vmem:[%s2108 + $0x10] sm:$0xf]
        %v2114 = vld [vmem:[%s2108 + $0x14] sm:$0xf]
        %v2115 = vld [vmem:[%s2108 + $0x18] sm:$0xf]
        %v2116 = vld [vmem:[%s2108 + $0x1c] sm:$0xf]
        %v2117 = vld [vmem:[%s2108 + $0x20] sm:$0xf]
        %v2118 = vld [vmem:[%s2108 + $0x24] sm:$0xf]
        %v2119 = vld [vmem:[%s2108 + $0x28] sm:$0xf]
        %v2120 = vld [vmem:[%s2108 + $0x2c] sm:$0xf]
        %v2121 = vld [vmem:[%s2108 + $0x30] sm:$0xf]
        %v2122 = vld [vmem:[%s2108 + $0x34] sm:$0xf]
        %v2123 = vld [vmem:[%s2108 + $0x38] sm:$0xf]
        %v2124 = vld [vmem:[%s2108 + $0x3c] sm:$0xf]
        %v2141 = vunpack.c.l.b16 %v2109
        %v2142 = vunpack.c.l.b16 %v2110
        %v2143 = vunpack.c.l.b16 %v2111
        %v2144 = vunpack.c.l.b16 %v2112
        %v2145 = vunpack.c.l.b16 %v2113
        %v2146 = vunpack.c.l.b16 %v2114
        %v2147 = vunpack.c.l.b16 %v2115
        %v2148 = vunpack.c.l.b16 %v2116
        %v2149 = vunpack.c.l.b16 %v2117
        %v2150 = vunpack.c.l.b16 %v2118
        %v2151 = vunpack.c.l.b16 %v2119
        %v2152 = vunpack.c.l.b16 %v2120
        %v2153 = vunpack.c.l.b16 %v2121
        %v2154 = vunpack.c.l.b16 %v2122
        %v2155 = vunpack.c.l.b16 %v2123
        %v2156 = vunpack.c.l.b16 %v2124
        %v2157 = vpack.c.b16 %v2142, %v2141
        %v2158 = vpack.c.b16 %v2144, %v2143
        %v2159 = vpack.c.b16 %v2146, %v2145
        %v2160 = vpack.c.b16 %v2148, %v2147
        %v2161 = vpack.c.b16 %v2150, %v2149
        %v2162 = vpack.c.b16 %v2152, %v2151
        %v2163 = vpack.c.b16 %v2154, %v2153
        %v2164 = vpack.c.b16 %v2156, %v2155
        %2173 = vmatprep.subr.bf16.mxu0 0
        %2174 = vmatpush1.bf16.msra.mxu0 %v2157
        %2175 = vmatprep.subr.bf16.mxu0 0
        %2176 = vmatpush1.bf16.msra.mxu0 %v2158
        %2177 = vmatprep.subr.bf16.mxu0 0
        %2178 = vmatpush1.bf16.msra.mxu0 %v2159
        %2179 = vmatprep.subr.bf16.mxu0 0
        %2180 = vmatpush1.bf16.msra.mxu0 %v2160
        %2181 = vmatprep.subr.bf16.mxu0 0
        %2182 = vmatpush1.bf16.msra.mxu0 %v2161
        %2183 = vmatprep.subr.bf16.mxu0 0
        %2184 = vmatpush1.bf16.msra.mxu0 %v2162
        %2185 = vmatprep.subr.bf16.mxu0 0
        %2186 = vmatpush1.bf16.msra.mxu0 %v2163
        %2187 = vmatprep.subr.bf16.mxu0 0
        %2188 = vmatpush1.bf16.msra.mxu0 %v2164
        %2189 = vmatprep.subr.bf16.mxu0 0
        %2190 = vmatpush1.bf16.msra.mxu0 0
        %2191 = vmatprep.subr.bf16.mxu0 0
        %2192 = vmatpush1.bf16.msra.mxu0 0
        %2193 = vmatprep.subr.bf16.mxu0 0
        %2194 = vmatpush1.bf16.msra.mxu0 0
        %2195 = vmatprep.subr.bf16.mxu0 0
        %2196 = vmatpush1.bf16.msra.mxu0 0
        %2197 = vmatprep.subr.bf16.mxu0 0
        %2198 = vmatpush1.bf16.msra.mxu0 0
        %2199 = vmatprep.subr.bf16.mxu0 0
        %2200 = vmatpush1.bf16.msra.mxu0 0
        %2201 = vmatprep.subr.bf16.mxu0 0
        %2202 = vmatpush1.bf16.msra.mxu0 0
        %2203 = vmatprep.subr.bf16.mxu0 0
        %2204 = vmatpush1.bf16.msra.mxu0 0
        %2205 = vmatprep.mubr.bf16.mxu0 0
        %2206 = vmatmul.mubr.bf16.gmra.mrb[0].mxu0 %v2107
        %v2207 = vpop.f32.mrb[0].mxu0
        %v2208 = vadd.f32 0.0, %v2207
        %v2209 = vpop.f32.mrb[0].mxu0
        %v2210 = vpop.f32.mrb[0].mxu0
        %v2211 = vpop.f32.mrb[0].mxu0
        %2212 = vdwg.mxu0
        %v2213 = vadd.f32 %v2101, %v2208
        %v2214 = vld [vmem:[#allocation11] sm:$0x1]
        %v2215 = vadd.f32 %v2213, %v2214
        %v2216 = vmax.f32 %v2215, 0.0
        %v2217 = vpack.c.bf16 %v2216, %v2216
        %v2218 = vld [vmem:[#allocation13] sm:$0xf]
        %v2219 = vld [vmem:[#allocation13 + $0x4] sm:$0xf]
        %v2220 = vld [vmem:[#allocation13 + $0x8] sm:$0xf]
        %v2221 = vld [vmem:[#allocation13 + $0xc] sm:$0xf]
        %v2222 = vld [vmem:[#allocation13 + $0x10] sm:$0xf]
        %v2223 = vld [vmem:[#allocation13 + $0x14] sm:$0xf]
        %v2224 = vld [vmem:[#allocation13 + $0x18] sm:$0xf]
        %v2225 = vld [vmem:[#allocation13 + $0x1c] sm:$0xf]
        %v2226 = vld [vmem:[#allocation13 + $0x20] sm:$0xf]
        %v2227 = vld [vmem:[#allocation13 + $0x24] sm:$0xf]
        %v2228 = vld [vmem:[#allocation13 + $0x28] sm:$0xf]
        %v2229 = vld [vmem:[#allocation13 + $0x2c] sm:$0xf]
        %v2230 = vld [vmem:[#allocation13 + $0x30] sm:$0xf]
        %v2231 = vld [vmem:[#allocation13 + $0x34] sm:$0xf]
        %v2232 = vld [vmem:[#allocation13 + $0x38] sm:$0xf]
        %v2233 = vld [vmem:[#allocation13 + $0x3c] sm:$0xf]
        %v2234 = vld [vmem:[#allocation14] sm:$0x1]
        %v2251 = vunpack.c.l.b16 %v2218
        %v2252 = vunpack.c.l.b16 %v2219
        %v2253 = vunpack.c.l.b16 %v2220
        %v2254 = vunpack.c.l.b16 %v2221
        %v2255 = vunpack.c.l.b16 %v2222
        %v2256 = vunpack.c.l.b16 %v2223
        %v2257 = vunpack.c.l.b16 %v2224
        %v2258 = vunpack.c.l.b16 %v2225
        %v2259 = vunpack.c.l.b16 %v2226
        %v2260 = vunpack.c.l.b16 %v2227
        %v2261 = vunpack.c.l.b16 %v2228
        %v2262 = vunpack.c.l.b16 %v2229
        %v2263 = vunpack.c.l.b16 %v2230
        %v2264 = vunpack.c.l.b16 %v2231
        %v2265 = vunpack.c.l.b16 %v2232
        %v2266 = vunpack.c.l.b16 %v2233
        %v2267 = vpack.c.b16 %v2252, %v2251
        %v2268 = vpack.c.b16 %v2254, %v2253
        %v2269 = vpack.c.b16 %v2256, %v2255
        %v2270 = vpack.c.b16 %v2258, %v2257
        %v2271 = vpack.c.b16 %v2260, %v2259
        %v2272 = vpack.c.b16 %v2262, %v2261
        %v2273 = vpack.c.b16 %v2264, %v2263
        %v2274 = vpack.c.b16 %v2266, %v2265
        %2283 = vmatprep.subr.bf16.mxu0 0
        %2284 = vmatpush1.bf16.msra.mxu0 %v2267
        %2285 = vmatprep.subr.bf16.mxu0 0
        %2286 = vmatpush1.bf16.msra.mxu0 %v2268
        %2287 = vmatprep.subr.bf16.mxu0 0
        %2288 = vmatpush1.bf16.msra.mxu0 %v2269
        %2289 = vmatprep.subr.bf16.mxu0 0
        %2290 = vmatpush1.bf16.msra.mxu0 %v2270
        %2291 = vmatprep.subr.bf16.mxu0 0
        %2292 = vmatpush1.bf16.msra.mxu0 %v2271
        %2293 = vmatprep.subr.bf16.mxu0 0
        %2294 = vmatpush1.bf16.msra.mxu0 %v2272
        %2295 = vmatprep.subr.bf16.mxu0 0
        %2296 = vmatpush1.bf16.msra.mxu0 %v2273
        %2297 = vmatprep.subr.bf16.mxu0 0
        %2298 = vmatpush1.bf16.msra.mxu0 %v2274
        %2299 = vmatprep.subr.bf16.mxu0 0
        %2300 = vmatpush1.bf16.msra.mxu0 0
        %2301 = vmatprep.subr.bf16.mxu0 0
        %2302 = vmatpush1.bf16.msra.mxu0 0
        %2303 = vmatprep.subr.bf16.mxu0 0
        %2304 = vmatpush1.bf16.msra.mxu0 0
        %2305 = vmatprep.subr.bf16.mxu0 0
        %2306 = vmatpush1.bf16.msra.mxu0 0
        %2307 = vmatprep.subr.bf16.mxu0 0
        %2308 = vmatpush1.bf16.msra.mxu0 0
        %2309 = vmatprep.subr.bf16.mxu0 0
        %2310 = vmatpush1.bf16.msra.mxu0 0
        %2311 = vmatprep.subr.bf16.mxu0 0
        %2312 = vmatpush1.bf16.msra.mxu0 0
        %2313 = vmatprep.subr.bf16.mxu0 0
        %2314 = vmatpush1.bf16.msra.mxu0 0
        %2315 = vmatprep.mubr.bf16.mxu0 0
        %2316 = vmatmul.mubr.bf16.gmra.mrb[0].mxu0 %v2217
        %v2317 = vpop.f32.mrb[0].mxu0
        %v2318 = vadd.f32 %v2234, %v2317
        %v2319 = vpop.f32.mrb[0].mxu0
        %v2320 = vpop.f32.mrb[0].mxu0
        %v2321 = vpop.f32.mrb[0].mxu0
        %2322 = vdwg.mxu0
        %v2323 = vmax.f32 %v2318, 0.0
        %v2324 = vpack.c.bf16 %v2323, %v2323
        %v2325 = vld [vmem:[#allocation16] sm:$0xf]
        %v2326 = vld [vmem:[#allocation16 + $0x4] sm:$0xf]
        %v2327 = vld [vmem:[#allocation16 + $0x8] sm:$0xf]
        %v2328 = vld [vmem:[#allocation16 + $0xc] sm:$0xf]
        %v2329 = vld [vmem:[#allocation16 + $0x10] sm:$0xf]
        %v2330 = vld [vmem:[#allocation16 + $0x14] sm:$0xf]
        %v2331 = vld [vmem:[#allocation16 + $0x18] sm:$0xf]
        %v2332 = vld [vmem:[#allocation16 + $0x1c] sm:$0xf]
        %v2333 = vld [vmem:[#allocation16 + $0x20] sm:$0xf]
        %v2334 = vld [vmem:[#allocation16 + $0x24] sm:$0xf]
        %v2335 = vld [vmem:[#allocation16 + $0x28] sm:$0xf]
        %v2336 = vld [vmem:[#allocation16 + $0x2c] sm:$0xf]
        %v2337 = vld [vmem:[#allocation16 + $0x30] sm:$0xf]
        %v2338 = vld [vmem:[#allocation16 + $0x34] sm:$0xf]
        %v2339 = vld [vmem:[#allocation16 + $0x38] sm:$0xf]
        %v2340 = vld [vmem:[#allocation16 + $0x3c] sm:$0xf]
        %v2341 = vld [vmem:[#allocation17] sm:$0x1]
        %v2358 = vunpack.c.l.b16 %v2325
        %v2359 = vunpack.c.l.b16 %v2326
        %v2360 = vunpack.c.l.b16 %v2327
        %v2361 = vunpack.c.l.b16 %v2328
        %v2362 = vunpack.c.l.b16 %v2329
        %v2363 = vunpack.c.l.b16 %v2330
        %v2364 = vunpack.c.l.b16 %v2331
        %v2365 = vunpack.c.l.b16 %v2332
        %v2366 = vunpack.c.l.b16 %v2333
        %v2367 = vunpack.c.l.b16 %v2334
        %v2368 = vunpack.c.l.b16 %v2335
        %v2369 = vunpack.c.l.b16 %v2336
        %v2370 = vunpack.c.l.b16 %v2337
        %v2371 = vunpack.c.l.b16 %v2338
        %v2372 = vunpack.c.l.b16 %v2339
        %v2373 = vunpack.c.l.b16 %v2340
        %v2374 = vpack.c.b16 %v2359, %v2358
        %v2375 = vpack.c.b16 %v2361, %v2360
        %v2376 = vpack.c.b16 %v2363, %v2362
        %v2377 = vpack.c.b16 %v2365, %v2364
        %v2378 = vpack.c.b16 %v2367, %v2366
        %v2379 = vpack.c.b16 %v2369, %v2368
        %v2380 = vpack.c.b16 %v2371, %v2370
        %v2381 = vpack.c.b16 %v2373, %v2372
        %2390 = vmatprep.subr.bf16.mxu0 0
        %2391 = vmatpush1.bf16.msra.mxu0 %v2374
        %2392 = vmatprep.subr.bf16.mxu0 0
        %2393 = vmatpush1.bf16.msra.mxu0 %v2375
        %2394 = vmatprep.subr.bf16.mxu0 0
        %2395 = vmatpush1.bf16.msra.mxu0 %v2376
        %2396 = vmatprep.subr.bf16.mxu0 0
        %2397 = vmatpush1.bf16.msra.mxu0 %v2377
        %2398 = vmatprep.subr.bf16.mxu0 0
        %2399 = vmatpush1.bf16.msra.mxu0 %v2378
        %2400 = vmatprep.subr.bf16.mxu0 0
        %2401 = vmatpush1.bf16.msra.mxu0 %v2379
        %2402 = vmatprep.subr.bf16.mxu0 0
        %2403 = vmatpush1.bf16.msra.mxu0 %v2380
        %2404 = vmatprep.subr.bf16.mxu0 0
        %2405 = vmatpush1.bf16.msra.mxu0 %v2381
        %2406 = vmatprep.subr.bf16.mxu0 0
        %2407 = vmatpush1.bf16.msra.mxu0 0
        %2408 = vmatprep.subr.bf16.mxu0 0
        %2409 = vmatpush1.bf16.msra.mxu0 0
        %2410 = vmatprep.subr.bf16.mxu0 0
        %2411 = vmatpush1.bf16.msra.mxu0 0
        %2412 = vmatprep.subr.bf16.mxu0 0
        %2413 = vmatpush1.bf16.msra.mxu0 0
        %2414 = vmatprep.subr.bf16.mxu0 0
        %2415 = vmatpush1.bf16.msra.mxu0 0
        %2416 = vmatprep.subr.bf16.mxu0 0
        %2417 = vmatpush1.bf16.msra.mxu0 0
        %2418 = vmatprep.subr.bf16.mxu0 0
        %2419 = vmatpush1.bf16.msra.mxu0 0
        %2420 = vmatprep.subr.bf16.mxu0 0
        %2421 = vmatpush1.bf16.msra.mxu0 0
        %2422 = vmatprep.mubr.bf16.mxu0 0
        %2423 = vmatmul.mubr.bf16.gmra.mrb[0].mxu0 %v2324
        %v2424 = vpop.f32.mrb[0].mxu0
        %v2425 = vadd.f32 %v2341, %v2424
        %v2426 = vpop.f32.mrb[0].mxu0
        %v2427 = vpop.f32.mrb[0].mxu0
        %v2428 = vpop.f32.mrb[0].mxu0
        %2429 = vdwg.mxu0
        %2430 = vst [vmem:[%s487] sm:$0x1] %v2425
        %s2431 = sand.u32 %s274, 1
        %s2432 = scalar_lea.sflag [#allocation7], %s2431
        %s2433 = sand.u32 %s274, 1
        %s2434 = scalar_lea.vmem [#allocation19], %s2433
        // Predicated region
        $region97: #{lenet5_forward.1} parent=63 // pred_check
          %p2435 = pneg %p284
        $region98: #{lenet5_forward.1} parent=63 // pred_check_branch
          %2437 = sbr.rel (%p2435) target = $region100
        $region99: #{lenet5_forward.1} parent=63 // pred_region
          %s2439 = ssub.s32 16, 16
          %2440 = vsyncadd %s2432, %s2439
          %s2441 = smul.addr %s30, 16
          %s2442 = scalar_lea.hbm %s11, %s2441
          %s2444 = sshll.u32 %s2434, 4
          %s2445 = int_to_ptr.vmem [resolvable:$true] %s2444
          %2447 = dma.vmem_to_hbm [thread:$0]  %s2445, 16, %s2442, %s2432
        $region100: #{lenet5_forward.1} parent=63 // pred_fallthru
          _
      $region64: #{lenet5_forward.1} parent=5 // pred_fallthru
        _
      %p2448 = scmp.le.s32.totalorder 2, %s25
      // Predicated region
      $region101: #{lenet5_forward.1} parent=5 // pred_check
        %p2449 = pneg %p2448
      $region102: #{lenet5_forward.1} parent=5 // pred_check_branch
        %2451 = sbr.rel (%p2449) target = $region104
      $region103: #{lenet5_forward.1} parent=5 // pred_region
        %s2452 = ssub.s32 %s25, 2
        // Predicated region
        $region105: #{lenet5_forward.1} parent=103 // pred_check
          %p2453 = pneg %p290
        $region106: #{lenet5_forward.1} parent=103 // pred_check_branch
          %2455 = sbr.rel (%p2453) target = $region108
        $region107: #{lenet5_forward.1} parent=103 // pred_region
          %s2456 = sand.u32 %s275, 1
          %s2457 = scalar_lea.sflag [#allocation7], %s2456
          %s2458 = sand.u32 %s275, 1
          %s2459 = scalar_lea.vmem [#allocation19], %s2458
          %2460 = dma.done %s2457, 16
        $region108: #{lenet5_forward.1} parent=103 // pred_fallthru
          _
      $region104: #{lenet5_forward.1} parent=5 // pred_fallthru
        _
    $region6: #{lenet5_forward.1} parent=1 // loop_footer
      %s29 = sadd.s32 1, %s25
    $region7: #{lenet5_forward.1} parent=1 // loop_footer_branch
      %24 = sbr.rel target = $region3
    $region8: #{lenet5_forward.1} parent=1 // loop_exit
      _
    %2461 = vsyncpa [#allocation6], 1
    %s2462 = scalar_lea.sflag [#allocation6], 1
    %2463 = vsyncpa %s2462, 1
    %2464 = vsyncpa [#allocation9], 1
    %2465 = vsyncpa [#allocation12], 1
    %2466 = vsyncpa [#allocation15], 1
    %2467 = vsyncpa [#allocation18], 1
    %2468 = vsyncpa [#allocation7], 1
    %s2469 = scalar_lea.sflag [#allocation7], 1
    %2470 = vsyncpa %s2469, 1

</llo_original>
